<compile_context>
chip_gen: v6e
topology: v6e:2x2x1
jax: 0.10.0
libtpu: 0.0.40
codegen_flags: <defaults>
</compile_context>

<pallas_src>
import functools

import jax
import jax.numpy as jnp
from jax.experimental import pallas as pl
from jax.experimental.pallas import tpu as pltpu


def _round_up(x, m):
    return ((x + m - 1) // m) * m


def attention_kernel(x_ref, wqkv_ref, wo_ref, gamma_ref, beta_ref, lmask_ref,
                     w1_ref, b1_ref, w2_ref, b2_ref, out_ref,
                     *, bblk, seq_len, head_num, h_pad, h_true, e_true,
                     compute_dtype):
    S = seq_len
    HN = head_num
    Hp = h_pad
    cd = compute_dtype
    rows = bblk * S
    inv_sqrt_h = jnp.float32(1.0 / (float(h_true) ** 0.5))
    inv_e = jnp.float32(1.0 / float(e_true))

    x = x_ref[...]            # (rows, Ep) f32 — kept f32 for residual / LayerNorm
    gamma = gamma_ref[...]    # (1, Ep), zero in padded lanes
    beta = beta_ref[...]      # (1, Ep), zero in padded lanes
    lmask = lmask_ref[...]    # (1, Ep), 1.0 on true lanes, 0.0 on padding
    b1 = b1_ref[...]          # (1, Fp)
    b2 = b2_ref[...]          # (1, Ep)

    def layer_norm(v):
        # Masked LayerNorm over the true E lanes only.  Padded lanes of v are
        # exactly 0 by construction (zero-padded weights/biases), so the mean
        # needs no mask; the centered term does.  gamma/beta are 0 on padded
        # lanes, so padded outputs stay 0 for the next residual.
        mean = jnp.sum(v, axis=-1, keepdims=True) * inv_e
        diff = v - mean
        var = jnp.sum((diff * lmask) ** 2, axis=-1, keepdims=True) * inv_e
        return diff * jax.lax.rsqrt(var + 1e-5) * gamma + beta

    # --- fused QKV projection for all heads: one lane-dense matmul ----------
    qkv = jnp.dot(x.astype(cd), wqkv_ref[...],
                  preferred_element_type=jnp.float32)      # (rows, 3*HN*Hp) f32
    qkv_c = qkv.astype(cd)                                 # one cast feeds all heads

    # --- per-head attention (trace-time loop; 128-aligned vreg slices) ------
    head_outs = []
    for i in range(HN):
        q3 = qkv_c[:, i * Hp:(i + 1) * Hp].reshape(bblk, S, Hp)
        k3 = qkv_c[:, (HN + i) * Hp:(HN + i + 1) * Hp].reshape(bblk, S, Hp)
        v3 = qkv_c[:, (2 * HN + i) * Hp:(2 * HN + i + 1) * Hp].reshape(bblk, S, Hp)

        # scores_t[b, k, q] = K[b,k] . Q[b,q]  (padded H lanes are zero).
        scores_t = jnp.einsum('bkh,bqh->bkq', k3, q3,
                              preferred_element_type=jnp.float32)

        # Reference: softmax over the *query* axis (dim=1 of (B,Sq,Sk)); in the
        # transposed layout that is the LAST (lane) axis -> lane-axis reduce.
        m = jnp.max(scores_t, axis=-1, keepdims=True)
        e = jnp.exp(scores_t - m)
        # EUP reciprocal; 1/sqrt(H) folded into the per-row factor so the only
        # full-tensor VPU op left is one multiply (reference divides AFTER the
        # softmax).
        r = pl.reciprocal(jnp.sum(e, axis=-1, keepdims=True), approx=True)
        att_t = e * (r * inv_sqrt_h)

        # vec[b,q,h] = sum_k att_t[b,k,q] * V[b,k,h]
        vec = jnp.einsum('bkq,bkh->bqh', att_t.astype(cd), v3,
                         preferred_element_type=jnp.float32)
        head_outs.append(vec.reshape(rows, Hp))

    att_vec = jnp.concatenate(head_outs, axis=-1)          # (rows, HN*Hp), aligned

    # --- output projection (single matmul == concat(heads) @ WO) ------------
    vector_att = jnp.dot(att_vec.astype(cd), wo_ref[...],
                         preferred_element_type=jnp.float32)
    vector_att = layer_norm(vector_att + x)

    # --- FFN: Linear(E->F) -> ReLU -> Linear(F->E), residual, LayerNorm ------
    hid = jnp.dot(vector_att.astype(cd), w1_ref[...],
                  preferred_element_type=jnp.float32) + b1
    hid = jnp.maximum(hid, 0.0)
    vector_ffn = jnp.dot(hid.astype(cd), w2_ref[...],
                         preferred_element_type=jnp.float32) + b2

    out_ref[...] = layer_norm(vector_ffn + vector_att).astype(out_ref.dtype)


def _default_bblk(batch):
    # Several grid steps so (a) BlockSpec double-buffering overlaps the X /
    # output HBM traffic with compute and (b) the "parallel" batch axis can be
    # sharded across TensorCores (2 TCs on v7x).  At production sizes also keep
    # bblk*S large enough (>= ~512 rows per step) to amortize per-step cost.
    for steps in (8, 4, 2):
        if batch % steps == 0:
            return batch // steps
    return 1


def attention_forward(x, params, *, head_num, hidden_size_att,
                      bblk=None, compute_dtype=jnp.float32,
                      out_dtype=jnp.float32, lane_multiple=128):
    wq, wk, wv, wo, gamma, beta, w1, b1, w2, b2 = params
    B, S, E = x.shape
    HN, H = head_num, hidden_size_att
    F = w1.shape[1]

    # Lane-dense padding (use lane_multiple=256 on v6e/v7x at production sizes).
    Ep = _round_up(E, lane_multiple)
    Fp = _round_up(F, lane_multiple)
    Hp = _round_up(H, lane_multiple)

    if bblk is None:
        bblk = _default_bblk(B)
    if (bblk * S) % 8 != 0:
        bblk = B            # full-array block is exempt from the sublane rule
    assert B % bblk == 0, "bblk must divide B"

    # --- wrapper-side (XLA) weight packing & zero padding: zero kernel cost ---
    def pad_head_w(w):      # (HN, E, H) -> (Ep, HN*Hp), head-major columns
        wp = jnp.pad(w, ((0, 0), (0, Ep - E), (0, Hp - H)))
        return jnp.transpose(wp, (1, 0, 2)).reshape(Ep, HN * Hp)

    w_qkv = jnp.concatenate([pad_head_w(wq), pad_head_w(wk), pad_head_w(wv)],
                            axis=1).astype(compute_dtype)       # (Ep, 3*HN*Hp)
    wo_p = jnp.pad(wo.reshape(HN, H, E),
                   ((0, 0), (0, Hp - H), (0, Ep - E))).reshape(HN * Hp, Ep)
    wo_p = wo_p.astype(compute_dtype)
    w1_p = jnp.pad(w1, ((0, Ep - E), (0, Fp - F))).astype(compute_dtype)
    w2_p = jnp.pad(w2, ((0, Fp - F), (0, Ep - E))).astype(compute_dtype)
    b1_p = jnp.pad(b1, ((0, 0), (0, Fp - F))).astype(jnp.float32)
    b2_p = jnp.pad(b2, ((0, 0), (0, Ep - E))).astype(jnp.float32)
    gamma_p = jnp.pad(gamma, ((0, 0), (0, Ep - E))).astype(jnp.float32)
    beta_p = jnp.pad(beta, ((0, 0), (0, Ep - E))).astype(jnp.float32)
    lmask = jnp.pad(jnp.ones((1, E), jnp.float32), ((0, 0), (0, Ep - E)))

    # Fold batch into the M (sublane) dimension of every matmul.
    x2d = jnp.pad(x.reshape(B * S, E), ((0, 0), (0, Ep - E))).astype(jnp.float32)

    kernel = functools.partial(
        attention_kernel, bblk=bblk, seq_len=S, head_num=HN, h_pad=Hp,
        h_true=H, e_true=E, compute_dtype=compute_dtype)

    def const_spec(arr):    # whole array resident, fetched once (constant index)
        return pl.BlockSpec(arr.shape, lambda b, n=arr.ndim: (0,) * n)

    out2d = pl.pallas_call(
        kernel,
        out_shape=jax.ShapeDtypeStruct((B * S, Ep), out_dtype),
        grid_spec=pltpu.PrefetchScalarGridSpec(
            num_scalar_prefetch=0,
            grid=(B // bblk,),
            in_specs=[
                pl.BlockSpec((bblk * S, Ep), lambda b: (b, 0)),   # X (flattened)
                const_spec(w_qkv), const_spec(wo_p),
                const_spec(gamma_p), const_spec(beta_p), const_spec(lmask),
                const_spec(w1_p), const_spec(b1_p),
                const_spec(w2_p), const_spec(b2_p),
            ],
            out_specs=pl.BlockSpec((bblk * S, Ep), lambda b: (b, 0)),
        ),
        compiler_params=pltpu.CompilerParams(
            dimension_semantics=("parallel",),        # no cross-batch dependency
            vmem_limit_bytes=32 * 1024 * 1024,        # raise v5e's 16 MiB default
        ),
    )(x2d, w_qkv, wo_p, gamma_p, beta_p, lmask, w1_p, b1_p, w2_p, b2_p)

    return out2d[:, :E].reshape(B, S, E)


def reference_forward(x, params, *, head_num, hidden_size_att):
    """Pure-JAX mirror of the PyTorch forward (for verification)."""
    wq, wk, wv, wo, gamma, beta, w1, b1, w2, b2 = params

    def ln(v):
        mean = v.mean(-1, keepdims=True)
        var = ((v - mean) ** 2).mean(-1, keepdims=True)
        return (v - mean) / jnp.sqrt(var + 1e-5) * gamma[0] + beta[0]

    vecs = []
    for i in range(head_num):
        Q = x @ wq[i]
        K = x @ wk[i]
        V = x @ wv[i]
        att = jax.nn.softmax(Q @ jnp.swapaxes(K, 2, 1), axis=1)
        att = att / jnp.sqrt(jnp.float32(hidden_size_att))
        vecs.append(att @ V)
    att_vec = jnp.concatenate(vecs, axis=2)
    vector_att = ln(att_vec @ wo + x)
    hid = jnp.maximum(vector_att @ w1 + b1[0], 0.0)
    vector_ffn = hid @ w2 + b2[0]
    return ln(vector_ffn + vector_att)


def init_params(key, *, embed_dim, hidden_size_att, hidden_size_ffn, head_num):
    ks = jax.random.split(key, 8)
    scale = 0.1  # keep activations in a sane f32 range; shapes match the module
    wq = scale * jax.random.normal(ks[0], (head_num, embed_dim, hidden_size_att), jnp.float32)
    wk = scale * jax.random.normal(ks[1], (head_num, embed_dim, hidden_size_att), jnp.float32)
    wv = scale * jax.random.normal(ks[2], (head_num, embed_dim, hidden_size_att), jnp.float32)
    wo = scale * jax.random.normal(ks[3], (hidden_size_att * head_num, embed_dim), jnp.float32)
    gamma = jnp.ones((1, embed_dim), jnp.float32)    # LayerNorm weight
    beta = jnp.zeros((1, embed_dim), jnp.float32)    # LayerNorm bias
    w1 = scale * jax.random.normal(ks[4], (embed_dim, hidden_size_ffn), jnp.float32)
    b1 = scale * jax.random.normal(ks[5], (1, hidden_size_ffn), jnp.float32)
    w2 = scale * jax.random.normal(ks[6], (hidden_size_ffn, embed_dim), jnp.float32)
    b2 = scale * jax.random.normal(ks[7], (1, embed_dim), jnp.float32)
    return (wq, wk, wv, wo, gamma, beta, w1, b1, w2, b2)


if __name__ == "__main__":
    B, S = 2, 8
    embed_dim = 32
    hidden_size_att = 16
    hidden_size_ffn = 64
    head_num = 2

    key = jax.random.PRNGKey(0)
    kx, kp = jax.random.split(key)
    x = jax.random.normal(kx, (B, S, embed_dim), jnp.float32)
    params = init_params(kp, embed_dim=embed_dim, hidden_size_att=hidden_size_att,
                         hidden_size_ffn=hidden_size_ffn, head_num=head_num)

    ref = reference_forward(x, params, head_num=head_num,
                            hidden_size_att=hidden_size_att)

    # f32 matmul path (only approximation: EUP reciprocal in the softmax).
    out = attention_forward(x, params, head_num=head_num,
                            hidden_size_att=hidden_size_att)
    out = jax.block_until_ready(out)
    assert out.shape == (B, S, embed_dim)
    assert jnp.allclose(out, ref, rtol=1e-2, atol=1e-2), \
        "mismatch vs pure-JAX reference"

    # bf16 MXU-operand path (f32 accumulation + f32 softmax/LayerNorm).
    out_bf16 = attention_forward(x, params, head_num=head_num,
                                 hidden_size_att=hidden_size_att,
                                 compute_dtype=jnp.bfloat16)
    out_bf16 = jax.block_until_ready(out_bf16)
    assert out_bf16.shape == (B, S, embed_dim)
    assert float(jnp.max(jnp.abs(out_bf16 - ref))) < 0.5, "bf16 path diverged grossly"

    print("KERNEL_OK")
</pallas_src>

<mosaic_0001>
module attributes {stable_mosaic.version = 11 : i64} {
  func.func @attention_kernel(%arg0: i32, %arg1: memref<8x128xf32, #tpu.memory_space<vmem>>, %arg2: memref<128x768xf32, #tpu.memory_space<vmem>>, %arg3: memref<256x128xf32, #tpu.memory_space<vmem>>, %arg4: memref<1x128xf32, #tpu.memory_space<vmem>>, %arg5: memref<1x128xf32, #tpu.memory_space<vmem>>, %arg6: memref<1x128xf32, #tpu.memory_space<vmem>>, %arg7: memref<128x128xf32, #tpu.memory_space<vmem>>, %arg8: memref<1x128xf32, #tpu.memory_space<vmem>>, %arg9: memref<128x128xf32, #tpu.memory_space<vmem>>, %arg10: memref<1x128xf32, #tpu.memory_space<vmem>>, %arg11: memref<8x128xf32, #tpu.memory_space<vmem>>) attributes {dimension_semantics = [#tpu.dimension_semantics<parallel>], iteration_bounds = array<i64: 2>, scalar_prefetch = 0 : i64, scratch_operands = 0 : i64, tpu.core_type = #tpu.core_type<tc>, window_params = [{transform_indices = @transform_0, window_bounds = array<i64: 8, 128>}, {pipeline_mode = #tpu.pipeline_mode<synchronous>, transform_indices = @transform_1, window_bounds = array<i64: 128, 768>}, {pipeline_mode = #tpu.pipeline_mode<synchronous>, transform_indices = @transform_2, window_bounds = array<i64: 256, 128>}, {pipeline_mode = #tpu.pipeline_mode<synchronous>, transform_indices = @transform_3, window_bounds = array<i64: 1, 128>}, {pipeline_mode = #tpu.pipeline_mode<synchronous>, transform_indices = @transform_4, window_bounds = array<i64: 1, 128>}, {pipeline_mode = #tpu.pipeline_mode<synchronous>, transform_indices = @transform_5, window_bounds = array<i64: 1, 128>}, {pipeline_mode = #tpu.pipeline_mode<synchronous>, transform_indices = @transform_6, window_bounds = array<i64: 128, 128>}, {pipeline_mode = #tpu.pipeline_mode<synchronous>, transform_indices = @transform_7, window_bounds = array<i64: 1, 128>}, {pipeline_mode = #tpu.pipeline_mode<synchronous>, transform_indices = @transform_8, window_bounds = array<i64: 128, 128>}, {pipeline_mode = #tpu.pipeline_mode<synchronous>, transform_indices = @transform_9, window_bounds = array<i64: 1, 128>}, {transform_indices = @transform_10, window_bounds = array<i64: 8, 128>}]} {
    %c0 = arith.constant 0 : index
    %c0_0 = arith.constant 0 : index
    %0 = vector.load %arg1[%c0, %c0_0] : memref<8x128xf32, #tpu.memory_space<vmem>>, vector<8x128xf32>
    %c0_1 = arith.constant 0 : index
    %c0_2 = arith.constant 0 : index
    %1 = vector.load %arg4[%c0_1, %c0_2] : memref<1x128xf32, #tpu.memory_space<vmem>>, vector<1x128xf32>
    %c0_3 = arith.constant 0 : index
    %c0_4 = arith.constant 0 : index
    %2 = vector.load %arg5[%c0_3, %c0_4] : memref<1x128xf32, #tpu.memory_space<vmem>>, vector<1x128xf32>
    %c0_5 = arith.constant 0 : index
    %c0_6 = arith.constant 0 : index
    %3 = vector.load %arg6[%c0_5, %c0_6] : memref<1x128xf32, #tpu.memory_space<vmem>>, vector<1x128xf32>
    %c0_7 = arith.constant 0 : index
    %c0_8 = arith.constant 0 : index
    %4 = vector.load %arg8[%c0_7, %c0_8] : memref<1x128xf32, #tpu.memory_space<vmem>>, vector<1x128xf32>
    %c0_9 = arith.constant 0 : index
    %c0_10 = arith.constant 0 : index
    %5 = vector.load %arg10[%c0_9, %c0_10] : memref<1x128xf32, #tpu.memory_space<vmem>>, vector<1x128xf32>
    %c0_11 = arith.constant 0 : index
    %c0_12 = arith.constant 0 : index
    %6 = vector.load %arg2[%c0_11, %c0_12] : memref<128x768xf32, #tpu.memory_space<vmem>>, vector<128x768xf32>
    %cst = arith.constant dense<0.000000e+00> : vector<8x768xf32>
    %7 = tpu.matmul %0, %6, %cst {dimension_numbers = #tpu.dot_dimension_numbers<[1], [0], [0], [1], [0, 0, 1, 1], [], []>} : vector<8x128xf32>, vector<128x768xf32>, vector<8x768xf32> -> vector<8x768xf32>
    %8 = vector.extract_strided_slice %7 {offsets = [0, 0], sizes = [8, 128], strides = [1, 1]} : vector<8x768xf32> to vector<8x128xf32>
    %9 = vector.shape_cast %8 : vector<8x128xf32> to vector<1x8x128xf32>
    %10 = vector.extract_strided_slice %7 {offsets = [0, 256], sizes = [8, 128], strides = [1, 1]} : vector<8x768xf32> to vector<8x128xf32>
    %11 = vector.shape_cast %10 : vector<8x128xf32> to vector<1x8x128xf32>
    %12 = vector.extract_strided_slice %7 {offsets = [0, 512], sizes = [8, 128], strides = [1, 1]} : vector<8x768xf32> to vector<8x128xf32>
    %13 = vector.shape_cast %12 : vector<8x128xf32> to vector<1x8x128xf32>
    "tpu.trace_start"() <{level = 10 : i32, message = "bkh,bqh->bkq"}> : () -> ()
    %cst_13 = arith.constant dense<0.000000e+00> : vector<1x8x8xf32>
    %14 = tpu.matmul %11, %9, %cst_13 {dimension_numbers = #tpu.dot_dimension_numbers<[2], [2], [1], [1], [0, 0, 0, 1, 1, 1], [0], [0]>} : vector<1x8x128xf32>, vector<1x8x128xf32>, vector<1x8x8xf32> -> vector<1x8x8xf32>
    "tpu.trace_stop"() : () -> ()
    %cst_14 = arith.constant dense<0xFF800000> : vector<1x8xf32>
    %15 = vector.multi_reduction <maximumf>, %14, %cst_14 [2] : vector<1x8x8xf32> to vector<1x8xf32>
    %16 = vector.shape_cast %15 : vector<1x8xf32> to vector<1x8x1xf32>
    %17 = vector.broadcast %16 : vector<1x8x1xf32> to vector<1x8x8xf32>
    %18 = arith.subf %14, %17 : vector<1x8x8xf32>
    %19 = math.exp %18 : vector<1x8x8xf32>
    %cst_15 = arith.constant dense<0.000000e+00> : vector<1x8xf32>
    %20 = vector.multi_reduction <add>, %19, %cst_15 [2] : vector<1x8x8xf32> to vector<1x8xf32>
    %21 = vector.shape_cast %20 : vector<1x8xf32> to vector<1x8x1xf32>
    %22 = tpu.reciprocal %21 {approx = true} : vector<1x8x1xf32> -> vector<1x8x1xf32>
    %cst_16 = arith.constant 2.500000e-01 : f32
    %23 = vector.broadcast %cst_16 : f32 to vector<1x8x1xf32>
    %24 = arith.mulf %22, %23 : vector<1x8x1xf32>
    %25 = vector.broadcast %24 : vector<1x8x1xf32> to vector<1x8x8xf32>
    %26 = arith.mulf %19, %25 : vector<1x8x8xf32>
    "tpu.trace_start"() <{level = 10 : i32, message = "bkq,bkh->bqh"}> : () -> ()
    %cst_17 = arith.constant dense<0.000000e+00> : vector<1x8x128xf32>
    %27 = tpu.matmul %26, %13, %cst_17 {dimension_numbers = #tpu.dot_dimension_numbers<[1], [1], [2], [2], [0, 0, 0, 2, 1, 2], [0], [0]>} : vector<1x8x8xf32>, vector<1x8x128xf32>, vector<1x8x128xf32> -> vector<1x8x128xf32>
    "tpu.trace_stop"() : () -> ()
    %28 = vector.shape_cast %27 : vector<1x8x128xf32> to vector<8x128xf32>
    %29 = vector.extract_strided_slice %7 {offsets = [0, 128], sizes = [8, 128], strides = [1, 1]} : vector<8x768xf32> to vector<8x128xf32>
    %30 = vector.shape_cast %29 : vector<8x128xf32> to vector<1x8x128xf32>
    %31 = vector.extract_strided_slice %7 {offsets = [0, 384], sizes = [8, 128], strides = [1, 1]} : vector<8x768xf32> to vector<8x128xf32>
    %32 = vector.shape_cast %31 : vector<8x128xf32> to vector<1x8x128xf32>
    %33 = vector.extract_strided_slice %7 {offsets = [0, 640], sizes = [8, 128], strides = [1, 1]} : vector<8x768xf32> to vector<8x128xf32>
    %34 = vector.shape_cast %33 : vector<8x128xf32> to vector<1x8x128xf32>
    "tpu.trace_start"() <{level = 10 : i32, message = "bkh,bqh->bkq"}> : () -> ()
    %cst_18 = arith.constant dense<0.000000e+00> : vector<1x8x8xf32>
    %35 = tpu.matmul %32, %30, %cst_18 {dimension_numbers = #tpu.dot_dimension_numbers<[2], [2], [1], [1], [0, 0, 0, 1, 1, 1], [0], [0]>} : vector<1x8x128xf32>, vector<1x8x128xf32>, vector<1x8x8xf32> -> vector<1x8x8xf32>
    "tpu.trace_stop"() : () -> ()
    %cst_19 = arith.constant dense<0xFF800000> : vector<1x8xf32>
    %36 = vector.multi_reduction <maximumf>, %35, %cst_19 [2] : vector<1x8x8xf32> to vector<1x8xf32>
    %37 = vector.shape_cast %36 : vector<1x8xf32> to vector<1x8x1xf32>
    %38 = vector.broadcast %37 : vector<1x8x1xf32> to vector<1x8x8xf32>
    %39 = arith.subf %35, %38 : vector<1x8x8xf32>
    %40 = math.exp %39 : vector<1x8x8xf32>
    %cst_20 = arith.constant dense<0.000000e+00> : vector<1x8xf32>
    %41 = vector.multi_reduction <add>, %40, %cst_20 [2] : vector<1x8x8xf32> to vector<1x8xf32>
    %42 = vector.shape_cast %41 : vector<1x8xf32> to vector<1x8x1xf32>
    %43 = tpu.reciprocal %42 {approx = true} : vector<1x8x1xf32> -> vector<1x8x1xf32>
    %cst_21 = arith.constant 2.500000e-01 : f32
    %44 = vector.broadcast %cst_21 : f32 to vector<1x8x1xf32>
    %45 = arith.mulf %43, %44 : vector<1x8x1xf32>
    %46 = vector.broadcast %45 : vector<1x8x1xf32> to vector<1x8x8xf32>
    %47 = arith.mulf %40, %46 : vector<1x8x8xf32>
    "tpu.trace_start"() <{level = 10 : i32, message = "bkq,bkh->bqh"}> : () -> ()
    %cst_22 = arith.constant dense<0.000000e+00> : vector<1x8x128xf32>
    %48 = tpu.matmul %47, %34, %cst_22 {dimension_numbers = #tpu.dot_dimension_numbers<[1], [1], [2], [2], [0, 0, 0, 2, 1, 2], [0], [0]>} : vector<1x8x8xf32>, vector<1x8x128xf32>, vector<1x8x128xf32> -> vector<1x8x128xf32>
    "tpu.trace_stop"() : () -> ()
    %49 = vector.shape_cast %48 : vector<1x8x128xf32> to vector<8x128xf32>
    %50 = tpu.concatenate %28, %49 in 1 : vector<8x128xf32>, vector<8x128xf32> -> vector<8x256xf32>
    %c0_23 = arith.constant 0 : index
    %c0_24 = arith.constant 0 : index
    %51 = vector.load %arg3[%c0_23, %c0_24] : memref<256x128xf32, #tpu.memory_space<vmem>>, vector<256x128xf32>
    %cst_25 = arith.constant dense<0.000000e+00> : vector<8x128xf32>
    %52 = tpu.matmul %50, %51, %cst_25 {dimension_numbers = #tpu.dot_dimension_numbers<[1], [0], [0], [1], [0, 0, 1, 1], [], []>} : vector<8x256xf32>, vector<256x128xf32>, vector<8x128xf32> -> vector<8x128xf32>
    %53 = arith.addf %52, %0 : vector<8x128xf32>
    %cst_26 = arith.constant dense<0.000000e+00> : vector<8xf32>
    %54 = vector.multi_reduction <add>, %53, %cst_26 [1] : vector<8x128xf32> to vector<8xf32>
    %55 = vector.shape_cast %54 : vector<8xf32> to vector<8x1xf32>
    %cst_27 = arith.constant 3.125000e-02 : f32
    %56 = vector.broadcast %cst_27 : f32 to vector<8x1xf32>
    %57 = arith.mulf %55, %56 : vector<8x1xf32>
    %58 = vector.broadcast %57 : vector<8x1xf32> to vector<8x128xf32>
    %59 = arith.subf %53, %58 : vector<8x128xf32>
    %60 = vector.broadcast %3 : vector<1x128xf32> to vector<8x128xf32>
    %61 = arith.mulf %59, %60 : vector<8x128xf32>
    %62 = arith.mulf %61, %61 : vector<8x128xf32>
    %cst_28 = arith.constant dense<0.000000e+00> : vector<8xf32>
    %63 = vector.multi_reduction <add>, %62, %cst_28 [1] : vector<8x128xf32> to vector<8xf32>
    %64 = vector.shape_cast %63 : vector<8xf32> to vector<8x1xf32>
    %cst_29 = arith.constant 3.125000e-02 : f32
    %65 = vector.broadcast %cst_29 : f32 to vector<8x1xf32>
    %66 = arith.mulf %64, %65 : vector<8x1xf32>
    %cst_30 = arith.constant 9.99999974E-6 : f32
    %67 = vector.broadcast %cst_30 : f32 to vector<8x1xf32>
    %68 = arith.addf %66, %67 : vector<8x1xf32>
    %69 = math.rsqrt %68 : vector<8x1xf32>
    %70 = vector.broadcast %69 : vector<8x1xf32> to vector<8x128xf32>
    %71 = arith.mulf %59, %70 : vector<8x128xf32>
    %72 = vector.broadcast %1 : vector<1x128xf32> to vector<8x128xf32>
    %73 = arith.mulf %71, %72 : vector<8x128xf32>
    %74 = vector.broadcast %2 : vector<1x128xf32> to vector<8x128xf32>
    %75 = arith.addf %73, %74 : vector<8x128xf32>
    %c0_31 = arith.constant 0 : index
    %c0_32 = arith.constant 0 : index
    %76 = vector.load %arg7[%c0_31, %c0_32] : memref<128x128xf32, #tpu.memory_space<vmem>>, vector<128x128xf32>
    %cst_33 = arith.constant dense<0.000000e+00> : vector<8x128xf32>
    %77 = tpu.matmul %75, %76, %cst_33 {dimension_numbers = #tpu.dot_dimension_numbers<[1], [0], [0], [1], [0, 0, 1, 1], [], []>} : vector<8x128xf32>, vector<128x128xf32>, vector<8x128xf32> -> vector<8x128xf32>
    %78 = vector.broadcast %4 : vector<1x128xf32> to vector<8x128xf32>
    %79 = arith.addf %77, %78 : vector<8x128xf32>
    %cst_34 = arith.constant 0.000000e+00 : f32
    %80 = vector.broadcast %cst_34 : f32 to vector<8x128xf32>
    %81 = arith.maximumf %79, %80 : vector<8x128xf32>
    %c0_35 = arith.constant 0 : index
    %c0_36 = arith.constant 0 : index
    %82 = vector.load %arg9[%c0_35, %c0_36] : memref<128x128xf32, #tpu.memory_space<vmem>>, vector<128x128xf32>
    %cst_37 = arith.constant dense<0.000000e+00> : vector<8x128xf32>
    %83 = tpu.matmul %81, %82, %cst_37 {dimension_numbers = #tpu.dot_dimension_numbers<[1], [0], [0], [1], [0, 0, 1, 1], [], []>} : vector<8x128xf32>, vector<128x128xf32>, vector<8x128xf32> -> vector<8x128xf32>
    %84 = vector.broadcast %5 : vector<1x128xf32> to vector<8x128xf32>
    %85 = arith.addf %83, %84 : vector<8x128xf32>
    %86 = arith.addf %85, %75 : vector<8x128xf32>
    %cst_38 = arith.constant dense<0.000000e+00> : vector<8xf32>
    %87 = vector.multi_reduction <add>, %86, %cst_38 [1] : vector<8x128xf32> to vector<8xf32>
    %88 = vector.shape_cast %87 : vector<8xf32> to vector<8x1xf32>
    %cst_39 = arith.constant 3.125000e-02 : f32
    %89 = vector.broadcast %cst_39 : f32 to vector<8x1xf32>
    %90 = arith.mulf %88, %89 : vector<8x1xf32>
    %91 = vector.broadcast %90 : vector<8x1xf32> to vector<8x128xf32>
    %92 = arith.subf %86, %91 : vector<8x128xf32>
    %93 = vector.broadcast %3 : vector<1x128xf32> to vector<8x128xf32>
    %94 = arith.mulf %92, %93 : vector<8x128xf32>
    %95 = arith.mulf %94, %94 : vector<8x128xf32>
    %cst_40 = arith.constant dense<0.000000e+00> : vector<8xf32>
    %96 = vector.multi_reduction <add>, %95, %cst_40 [1] : vector<8x128xf32> to vector<8xf32>
    %97 = vector.shape_cast %96 : vector<8xf32> to vector<8x1xf32>
    %cst_41 = arith.constant 3.125000e-02 : f32
    %98 = vector.broadcast %cst_41 : f32 to vector<8x1xf32>
    %99 = arith.mulf %97, %98 : vector<8x1xf32>
    %cst_42 = arith.constant 9.99999974E-6 : f32
    %100 = vector.broadcast %cst_42 : f32 to vector<8x1xf32>
    %101 = arith.addf %99, %100 : vector<8x1xf32>
    %102 = math.rsqrt %101 : vector<8x1xf32>
    %103 = vector.broadcast %102 : vector<8x1xf32> to vector<8x128xf32>
    %104 = arith.mulf %92, %103 : vector<8x128xf32>
    %105 = vector.broadcast %1 : vector<1x128xf32> to vector<8x128xf32>
    %106 = arith.mulf %104, %105 : vector<8x128xf32>
    %107 = vector.broadcast %2 : vector<1x128xf32> to vector<8x128xf32>
    %108 = arith.addf %106, %107 : vector<8x128xf32>
    %c0_43 = arith.constant 0 : index
    %c0_44 = arith.constant 0 : index
    %109 = vector.load %arg11[%c0_43, %c0_44] : memref<8x128xf32, #tpu.memory_space<vmem>>, vector<8x128xf32>
    tpu.vector_store %arg11[%c0_43, %c0_44], %108 {strides = array<i32>} : memref<8x128xf32, #tpu.memory_space<vmem>>, vector<8x128xf32>,
    return
  }
  func.func @transform_0(%arg0: i32) -> (i32, i32) {
    %c0_i32 = arith.constant 0 : i32
    %c0_i32_0 = arith.constant 0 : i32
    return %arg0, %c0_i32 : i32, i32
  }
  func.func @transform_1(%arg0: i32) -> (i32, i32) {
    %c0_i32 = arith.constant 0 : i32
    %c0_i32_0 = arith.constant 0 : i32
    %c0_i32_1 = arith.constant 0 : i32
    return %c0_i32, %c0_i32_0 : i32, i32
  }
  func.func @transform_2(%arg0: i32) -> (i32, i32) {
    %c0_i32 = arith.constant 0 : i32
    %c0_i32_0 = arith.constant 0 : i32
    %c0_i32_1 = arith.constant 0 : i32
    return %c0_i32, %c0_i32_0 : i32, i32
  }
  func.func @transform_3(%arg0: i32) -> (i32, i32) {
    %c0_i32 = arith.constant 0 : i32
    %c0_i32_0 = arith.constant 0 : i32
    %c0_i32_1 = arith.constant 0 : i32
    return %c0_i32, %c0_i32_0 : i32, i32
  }
  func.func @transform_4(%arg0: i32) -> (i32, i32) {
    %c0_i32 = arith.constant 0 : i32
    %c0_i32_0 = arith.constant 0 : i32
    %c0_i32_1 = arith.constant 0 : i32
    return %c0_i32, %c0_i32_0 : i32, i32
  }
  func.func @transform_5(%arg0: i32) -> (i32, i32) {
    %c0_i32 = arith.constant 0 : i32
    %c0_i32_0 = arith.constant 0 : i32
    %c0_i32_1 = arith.constant 0 : i32
    return %c0_i32, %c0_i32_0 : i32, i32
  }
  func.func @transform_6(%arg0: i32) -> (i32, i32) {
    %c0_i32 = arith.constant 0 : i32
    %c0_i32_0 = arith.constant 0 : i32
    %c0_i32_1 = arith.constant 0 : i32
    return %c0_i32, %c0_i32_0 : i32, i32
  }
  func.func @transform_7(%arg0: i32) -> (i32, i32) {
    %c0_i32 = arith.constant 0 : i32
    %c0_i32_0 = arith.constant 0 : i32
    %c0_i32_1 = arith.constant 0 : i32
    return %c0_i32, %c0_i32_0 : i32, i32
  }
  func.func @transform_8(%arg0: i32) -> (i32, i32) {
    %c0_i32 = arith.constant 0 : i32
    %c0_i32_0 = arith.constant 0 : i32
    %c0_i32_1 = arith.constant 0 : i32
    return %c0_i32, %c0_i32_0 : i32, i32
  }
  func.func @transform_9(%arg0: i32) -> (i32, i32) {
    %c0_i32 = arith.constant 0 : i32
    %c0_i32_0 = arith.constant 0 : i32
    %c0_i32_1 = arith.constant 0 : i32
    return %c0_i32, %c0_i32_0 : i32, i32
  }
  func.func @transform_10(%arg0: i32) -> (i32, i32) {
    %c0_i32 = arith.constant 0 : i32
    %c0_i32_0 = arith.constant 0 : i32
    return %arg0, %c0_i32 : i32, i32
  }
}

</mosaic_0001>

<llo_original>
// kernel: tpu_custom_call.1
$region0: #{tpu_custom_call.1}
  #allocation0 [shape = 'u32[]', space=smem, size = 0x4, offset = 0x4, fixed_abs, tag = 'smem constant byte address 0x4 - core index']
  #allocation1 [shape = 'u32[144,128]{1,0:T(1,128)}', space=vmem, size = 0x12000, scoped, tag = 'internal scratch']
  %s0 = inlined_call_operand.hbm [shape: f32[16,128], index: 0, kind: input, shape index: {}]
  %s1 = inlined_call_operand.hbm [shape: f32[128,768], index: 1, kind: input, shape index: {}]
  %s2 = inlined_call_operand.hbm [shape: f32[256,128], index: 2, kind: input, shape index: {}]
  %s3 = inlined_call_operand.vmem [shape: f32[1,128], index: 3, kind: input, shape index: {}]
  %s4 = inlined_call_operand.vmem [shape: f32[1,128], index: 4, kind: input, shape index: {}]
  %s5 = inlined_call_operand.vmem [shape: f32[1,128], index: 5, kind: input, shape index: {}]
  %s6 = inlined_call_operand.hbm [shape: f32[128,128], index: 6, kind: input, shape index: {}]
  %s7 = inlined_call_operand.vmem [shape: f32[1,128], index: 7, kind: input, shape index: {}]
  %s8 = inlined_call_operand.hbm [shape: f32[128,128], index: 8, kind: input, shape index: {}]
  %s9 = inlined_call_operand.vmem [shape: f32[1,128], index: 9, kind: input, shape index: {}]
  %s10 = inlined_call_operand.hbm [shape: f32[16,128], index: 10, kind: output, shape index: {}]
  %s11 = sld [smem:[#allocation0]]
  $region93: #{tpu_custom_call.1} parent=0
    _
  %s13 = ssub.s32 1, %s11
  %s14 = scalar_select 0, %s13, %s11
  $region1: #{tpu_custom_call.1} parent=0
    #allocation2 [shape = 'u8[8192]{0}', space=vmem, size = 0x2000, scoped, tag = 'input window, operand 0']
    #allocation3 [shape = 's32[2]{0}', space=sflag, size = 0x8, scoped, tag = 'scoped memory for tpu_custom_call.1']
    #allocation4 [shape = 's32[2]{0}', space=sflag, size = 0x8, scoped, tag = 'scoped memory for tpu_custom_call.1']
    #allocation5 [shape = 'u8[393216]{0}', space=vmem, size = 0x60000, scoped, tag = 'input window, operand 1, single buffered']
    #allocation6 [shape = 's32[1]{0}', space=sflag, size = 0x4, scoped, tag = 'scoped memory for tpu_custom_call.1']
    #allocation7 [shape = 'u8[131072]{0}', space=vmem, size = 0x20000, scoped, tag = 'input window, operand 2, single buffered']
    #allocation8 [shape = 'u8[65536]{0}', space=vmem, size = 0x10000, scoped, tag = 'input window, operand 6, single buffered']
    #allocation9 [shape = 's32[1]{0}', space=sflag, size = 0x4, scoped, tag = 'scoped memory for tpu_custom_call.1']
    #allocation10 [shape = 'u8[65536]{0}', space=vmem, size = 0x10000, scoped, tag = 'input window, operand 8, single buffered']
    #allocation11 [shape = 'u8[8192]{0}', space=vmem, size = 0x2000, scoped, tag = 'output window, operand 0']
    %15 = vsyncpa [#allocation3], 0
    %s16 = scalar_lea.sflag [#allocation3], 1
    %17 = vsyncpa %s16, 0
    %18 = vsyncpa [#allocation6], 0
    %19 = vsyncpa [#allocation9], 0
    %20 = vsyncpa [#allocation4], 0
    %s21 = scalar_lea.sflag [#allocation4], 1
    %22 = vsyncpa %s21, 0
    loop: start=0, step=1, limit=4
    $region2: #{tpu_custom_call.1} parent=1 // loop_pre_header
      _
    $region3: #{tpu_custom_call.1} parent=1 // loop_header
      %s24 = sphi 0, %s28
      %p25 = scmp.ge.s32.totalorder %s24, 4
      %s34 = sphi 0, %s36
      %s37 = sphi 0, %s34
      %s38 = sphi 0, %s37
      %s54 = sphi 0, %s38
      %s58 = sphi 0, %s58
      %s60 = sphi 0, %s58
      %s61 = sphi 0, %s60
      %s75 = sphi 0, %s61
      %s79 = sphi 0, %s79
      %s81 = sphi 0, %s79
      %s82 = sphi 0, %s81
      %s96 = sphi 0, %s82
      %s100 = sphi 0, %s100
      %s102 = sphi 0, %s100
      %s103 = sphi 0, %s102
      %s117 = sphi 0, %s103
      %s121 = sphi 0, %s121
      %s123 = sphi 0, %s121
      %s124 = sphi 0, %s123
      %s138 = sphi 0, %s124
      %s142 = sphi 0, %s142
      %s144 = sphi 0, %s142
      %s145 = sphi 0, %s144
      %s159 = sphi 0, %s145
      %s163 = sphi 0, %s163
      %s165 = sphi 0, %s163
      %s166 = sphi 0, %s165
      %s180 = sphi 0, %s166
      %s184 = sphi 0, %s184
      %s186 = sphi 0, %s184
      %s187 = sphi 0, %s186
      %s201 = sphi 0, %s187
      %s205 = sphi 0, %s205
      %s207 = sphi 0, %s205
      %s208 = sphi 0, %s207
      %s222 = sphi 0, %s208
      %s226 = sphi 0, %s226
      %s228 = sphi 0, %s226
      %s229 = sphi 0, %s228
      %s243 = sphi 0, %s229
      %s249 = sphi 0, %s251
      %s252 = sphi 0, %s249
      %s253 = sphi 0, %s252
      %s269 = sphi 0, %s253
    $region4: #{tpu_custom_call.1} parent=1 // loop_header_branch
      %27 = sbr.rel (%p25) target = $region8
    $region5: #{tpu_custom_call.1} parent=1 // loop_body
      %s29 = ssub.s32 %s24, 1
      %s30 = ssub.s32 %s24, 2
      %s31 = sadd.s32 %s24, 1
      %s32 = ssub.s32 %s24, %s31
      %p33 = scmp.eq.s32.totalorder %s32, 0
      %s35 = sadd.s32 %s34, 1
      %s36 = scalar_select %p33, %s34, %s35
      %p39 = pneg %p33
      %p40 = scmp.eq.s32.totalorder %s24, 1
      %p41 = por %p39, %p40
      %p42 = scmp.ne.s32.totalorder %s34, %s37
      %p43 = scmp.eq.s32.totalorder %s24, 0
      %p44 = por %p42, %p43
      %p45 = scmp.ne.s32.totalorder %s34, %s37
      %p46 = scmp.eq.s32.totalorder %s29, 1
      %p47 = por %p45, %p46
      %p48 = scmp.ne.s32.totalorder %s37, %s38
      %p49 = scmp.eq.s32.totalorder %s29, 0
      %p50 = por %p48, %p49
      %p51 = scmp.ne.s32.totalorder %s37, %s38
      %p52 = scmp.eq.s32.totalorder %s30, 1
      %p53 = por %p51, %p52
      %p55 = scmp.ne.s32.totalorder %s38, %s54
      %p56 = scmp.eq.s32.totalorder %s30, 0
      %p57 = por %p55, %p56
      %s59 = sadd.s32 %s58, 1
      %p62 = scmp.eq.s32.totalorder %s24, 1
      %p63 = scmp.ne.s32.totalorder %s58, %s60
      %p64 = scmp.eq.s32.totalorder %s24, 0
      %p65 = por %p63, %p64
      %p66 = scmp.ne.s32.totalorder %s58, %s60
      %p67 = scmp.eq.s32.totalorder %s29, 1
      %p68 = por %p66, %p67
      %p69 = scmp.ne.s32.totalorder %s60, %s61
      %p70 = scmp.eq.s32.totalorder %s29, 0
      %p71 = por %p69, %p70
      %p72 = scmp.ne.s32.totalorder %s60, %s61
      %p73 = scmp.eq.s32.totalorder %s30, 1
      %p74 = por %p72, %p73
      %p76 = scmp.ne.s32.totalorder %s61, %s75
      %p77 = scmp.eq.s32.totalorder %s30, 0
      %p78 = por %p76, %p77
      %s80 = sadd.s32 %s79, 1
      %p83 = scmp.eq.s32.totalorder %s24, 1
      %p84 = scmp.ne.s32.totalorder %s79, %s81
      %p85 = scmp.eq.s32.totalorder %s24, 0
      %p86 = por %p84, %p85
      %p87 = scmp.ne.s32.totalorder %s79, %s81
      %p88 = scmp.eq.s32.totalorder %s29, 1
      %p89 = por %p87, %p88
      %p90 = scmp.ne.s32.totalorder %s81, %s82
      %p91 = scmp.eq.s32.totalorder %s29, 0
      %p92 = por %p90, %p91
      %p93 = scmp.ne.s32.totalorder %s81, %s82
      %p94 = scmp.eq.s32.totalorder %s30, 1
      %p95 = por %p93, %p94
      %p97 = scmp.ne.s32.totalorder %s82, %s96
      %p98 = scmp.eq.s32.totalorder %s30, 0
      %p99 = por %p97, %p98
      %s101 = sadd.s32 %s100, 1
      %p104 = scmp.eq.s32.totalorder %s24, 1
      %p105 = scmp.ne.s32.totalorder %s100, %s102
      %p106 = scmp.eq.s32.totalorder %s24, 0
      %p107 = por %p105, %p106
      %p108 = scmp.ne.s32.totalorder %s100, %s102
      %p109 = scmp.eq.s32.totalorder %s29, 1
      %p110 = por %p108, %p109
      %p111 = scmp.ne.s32.totalorder %s102, %s103
      %p112 = scmp.eq.s32.totalorder %s29, 0
      %p113 = por %p111, %p112
      %p114 = scmp.ne.s32.totalorder %s102, %s103
      %p115 = scmp.eq.s32.totalorder %s30, 1
      %p116 = por %p114, %p115
      %p118 = scmp.ne.s32.totalorder %s103, %s117
      %p119 = scmp.eq.s32.totalorder %s30, 0
      %p120 = por %p118, %p119
      %s122 = sadd.s32 %s121, 1
      %p125 = scmp.eq.s32.totalorder %s24, 1
      %p126 = scmp.ne.s32.totalorder %s121, %s123
      %p127 = scmp.eq.s32.totalorder %s24, 0
      %p128 = por %p126, %p127
      %p129 = scmp.ne.s32.totalorder %s121, %s123
      %p130 = scmp.eq.s32.totalorder %s29, 1
      %p131 = por %p129, %p130
      %p132 = scmp.ne.s32.totalorder %s123, %s124
      %p133 = scmp.eq.s32.totalorder %s29, 0
      %p134 = por %p132, %p133
      %p135 = scmp.ne.s32.totalorder %s123, %s124
      %p136 = scmp.eq.s32.totalorder %s30, 1
      %p137 = por %p135, %p136
      %p139 = scmp.ne.s32.totalorder %s124, %s138
      %p140 = scmp.eq.s32.totalorder %s30, 0
      %p141 = por %p139, %p140
      %s143 = sadd.s32 %s142, 1
      %p146 = scmp.eq.s32.totalorder %s24, 1
      %p147 = scmp.ne.s32.totalorder %s142, %s144
      %p148 = scmp.eq.s32.totalorder %s24, 0
      %p149 = por %p147, %p148
      %p150 = scmp.ne.s32.totalorder %s142, %s144
      %p151 = scmp.eq.s32.totalorder %s29, 1
      %p152 = por %p150, %p151
      %p153 = scmp.ne.s32.totalorder %s144, %s145
      %p154 = scmp.eq.s32.totalorder %s29, 0
      %p155 = por %p153, %p154
      %p156 = scmp.ne.s32.totalorder %s144, %s145
      %p157 = scmp.eq.s32.totalorder %s30, 1
      %p158 = por %p156, %p157
      %p160 = scmp.ne.s32.totalorder %s145, %s159
      %p161 = scmp.eq.s32.totalorder %s30, 0
      %p162 = por %p160, %p161
      %s164 = sadd.s32 %s163, 1
      %p167 = scmp.eq.s32.totalorder %s24, 1
      %p168 = scmp.ne.s32.totalorder %s163, %s165
      %p169 = scmp.eq.s32.totalorder %s24, 0
      %p170 = por %p168, %p169
      %p171 = scmp.ne.s32.totalorder %s163, %s165
      %p172 = scmp.eq.s32.totalorder %s29, 1
      %p173 = por %p171, %p172
      %p174 = scmp.ne.s32.totalorder %s165, %s166
      %p175 = scmp.eq.s32.totalorder %s29, 0
      %p176 = por %p174, %p175
      %p177 = scmp.ne.s32.totalorder %s165, %s166
      %p178 = scmp.eq.s32.totalorder %s30, 1
      %p179 = por %p177, %p178
      %p181 = scmp.ne.s32.totalorder %s166, %s180
      %p182 = scmp.eq.s32.totalorder %s30, 0
      %p183 = por %p181, %p182
      %s185 = sadd.s32 %s184, 1
      %p188 = scmp.eq.s32.totalorder %s24, 1
      %p189 = scmp.ne.s32.totalorder %s184, %s186
      %p190 = scmp.eq.s32.totalorder %s24, 0
      %p191 = por %p189, %p190
      %p192 = scmp.ne.s32.totalorder %s184, %s186
      %p193 = scmp.eq.s32.totalorder %s29, 1
      %p194 = por %p192, %p193
      %p195 = scmp.ne.s32.totalorder %s186, %s187
      %p196 = scmp.eq.s32.totalorder %s29, 0
      %p197 = por %p195, %p196
      %p198 = scmp.ne.s32.totalorder %s186, %s187
      %p199 = scmp.eq.s32.totalorder %s30, 1
      %p200 = por %p198, %p199
      %p202 = scmp.ne.s32.totalorder %s187, %s201
      %p203 = scmp.eq.s32.totalorder %s30, 0
      %p204 = por %p202, %p203
      %s206 = sadd.s32 %s205, 1
      %p209 = scmp.eq.s32.totalorder %s24, 1
      %p210 = scmp.ne.s32.totalorder %s205, %s207
      %p211 = scmp.eq.s32.totalorder %s24, 0
      %p212 = por %p210, %p211
      %p213 = scmp.ne.s32.totalorder %s205, %s207
      %p214 = scmp.eq.s32.totalorder %s29, 1
      %p215 = por %p213, %p214
      %p216 = scmp.ne.s32.totalorder %s207, %s208
      %p217 = scmp.eq.s32.totalorder %s29, 0
      %p218 = por %p216, %p217
      %p219 = scmp.ne.s32.totalorder %s207, %s208
      %p220 = scmp.eq.s32.totalorder %s30, 1
      %p221 = por %p219, %p220
      %p223 = scmp.ne.s32.totalorder %s208, %s222
      %p224 = scmp.eq.s32.totalorder %s30, 0
      %p225 = por %p223, %p224
      %s227 = sadd.s32 %s226, 1
      %p230 = scmp.eq.s32.totalorder %s24, 1
      %p231 = scmp.ne.s32.totalorder %s226, %s228
      %p232 = scmp.eq.s32.totalorder %s24, 0
      %p233 = por %p231, %p232
      %p234 = scmp.ne.s32.totalorder %s226, %s228
      %p235 = scmp.eq.s32.totalorder %s29, 1
      %p236 = por %p234, %p235
      %p237 = scmp.ne.s32.totalorder %s228, %s229
      %p238 = scmp.eq.s32.totalorder %s29, 0
      %p239 = por %p237, %p238
      %p240 = scmp.ne.s32.totalorder %s228, %s229
      %p241 = scmp.eq.s32.totalorder %s30, 1
      %p242 = por %p240, %p241
      %p244 = scmp.ne.s32.totalorder %s229, %s243
      %p245 = scmp.eq.s32.totalorder %s30, 0
      %p246 = por %p244, %p245
      %s247 = ssub.s32 %s24, %s31
      %p248 = scmp.eq.s32.totalorder %s247, 0
      %s250 = sadd.s32 %s249, 1
      %s251 = scalar_select %p248, %s249, %s250
      %p254 = pneg %p248
      %p255 = scmp.eq.s32.totalorder %s24, 1
      %p256 = por %p254, %p255
      %p257 = scmp.ne.s32.totalorder %s249, %s252
      %p258 = scmp.eq.s32.totalorder %s24, 0
      %p259 = por %p257, %p258
      %p260 = scmp.ne.s32.totalorder %s249, %s252
      %p261 = scmp.eq.s32.totalorder %s29, 1
      %p262 = por %p260, %p261
      %p263 = scmp.ne.s32.totalorder %s252, %s253
      %p264 = scmp.eq.s32.totalorder %s29, 0
      %p265 = por %p263, %p264
      %p266 = scmp.ne.s32.totalorder %s252, %s253
      %p267 = scmp.eq.s32.totalorder %s30, 1
      %p268 = por %p266, %p267
      %p270 = scmp.ne.s32.totalorder %s253, %s269
      %p271 = scmp.eq.s32.totalorder %s30, 0
      %p272 = por %p270, %p271
      %p273 = scmp.le.s32.totalorder 1, %s24
      %p274 = scmp.lt.s32.totalorder %s24, 3
      %p275 = pnand %p273, %p274
      %p276 = pneg %p275
      // Predicated region
      $region9: #{tpu_custom_call.1} parent=5 // pred_check
        _
      $region10: #{tpu_custom_call.1} parent=5 // pred_check_branch
        %278 = sbr.rel (%p275) target = $region12
      $region11: #{tpu_custom_call.1} parent=5 // pred_region
        %s279 = ssub.s32 %s24, 1
        // Predicated region
        $region13: #{tpu_custom_call.1} parent=11 // pred_check
          %p280 = pneg %p71
        $region14: #{tpu_custom_call.1} parent=11 // pred_check_branch
          %282 = sbr.rel (%p280) target = $region16
        $region15: #{tpu_custom_call.1} parent=11 // pred_region
          %s284 = ssub.s32 12288, 12288
          %285 = vsyncadd [#allocation6], %s284
          %s286 = sshll.u32 [#allocation5], 4
          %s287 = int_to_ptr.vmem [resolvable:$true] %s286
          %292 = dma.hbm_to_vmem [thread:$0]  %s1, 12288, %s287, [#allocation6], 768, 768, 48
        $region16: #{tpu_custom_call.1} parent=11 // pred_fallthru
          _
        // Predicated region
        $region17: #{tpu_custom_call.1} parent=11 // pred_check
          %p293 = pneg %p92
        $region18: #{tpu_custom_call.1} parent=11 // pred_check_branch
          %295 = sbr.rel (%p293) target = $region20
        $region19: #{tpu_custom_call.1} parent=11 // pred_region
          %s297 = ssub.s32 4096, 4096
          %298 = vsyncadd [#allocation6], %s297
          %s299 = sshll.u32 [#allocation7], 4
          %s300 = int_to_ptr.vmem [resolvable:$true] %s299
          %305 = dma.hbm_to_vmem [thread:$0]  %s2, 4096, %s300, [#allocation6], 128, 128, 8
        $region20: #{tpu_custom_call.1} parent=11 // pred_fallthru
          _
        // Predicated region
        $region21: #{tpu_custom_call.1} parent=11 // pred_check
          %p306 = pneg %p113
        $region22: #{tpu_custom_call.1} parent=11 // pred_check_branch
          %308 = sbr.rel (%p306) target = $region24
        $region23: #{tpu_custom_call.1} parent=11 // pred_region
          _
        $region24: #{tpu_custom_call.1} parent=11 // pred_fallthru
          _
        // Predicated region
        $region25: #{tpu_custom_call.1} parent=11 // pred_check
          %p309 = pneg %p134
        $region26: #{tpu_custom_call.1} parent=11 // pred_check_branch
          %311 = sbr.rel (%p309) target = $region28
        $region27: #{tpu_custom_call.1} parent=11 // pred_region
          _
        $region28: #{tpu_custom_call.1} parent=11 // pred_fallthru
          _
        // Predicated region
        $region29: #{tpu_custom_call.1} parent=11 // pred_check
          %p312 = pneg %p155
        $region30: #{tpu_custom_call.1} parent=11 // pred_check_branch
          %314 = sbr.rel (%p312) target = $region32
        $region31: #{tpu_custom_call.1} parent=11 // pred_region
          _
        $region32: #{tpu_custom_call.1} parent=11 // pred_fallthru
          _
        // Predicated region
        $region33: #{tpu_custom_call.1} parent=11 // pred_check
          %p315 = pneg %p176
        $region34: #{tpu_custom_call.1} parent=11 // pred_check_branch
          %317 = sbr.rel (%p315) target = $region36
        $region35: #{tpu_custom_call.1} parent=11 // pred_region
          %s319 = ssub.s32 2048, 2048
          %320 = vsyncadd [#allocation9], %s319
          %s321 = sshll.u32 [#allocation8], 4
          %s322 = int_to_ptr.vmem [resolvable:$true] %s321
          %327 = dma.hbm_to_vmem [thread:$0]  %s6, 2048, %s322, [#allocation9], 128, 128, 8
        $region36: #{tpu_custom_call.1} parent=11 // pred_fallthru
          _
        // Predicated region
        $region37: #{tpu_custom_call.1} parent=11 // pred_check
          %p328 = pneg %p197
        $region38: #{tpu_custom_call.1} parent=11 // pred_check_branch
          %330 = sbr.rel (%p328) target = $region40
        $region39: #{tpu_custom_call.1} parent=11 // pred_region
          _
        $region40: #{tpu_custom_call.1} parent=11 // pred_fallthru
          _
        // Predicated region
        $region41: #{tpu_custom_call.1} parent=11 // pred_check
          %p331 = pneg %p218
        $region42: #{tpu_custom_call.1} parent=11 // pred_check_branch
          %333 = sbr.rel (%p331) target = $region44
        $region43: #{tpu_custom_call.1} parent=11 // pred_region
          %s335 = ssub.s32 2048, 2048
          %336 = vsyncadd [#allocation9], %s335
          %s337 = sshll.u32 [#allocation10], 4
          %s338 = int_to_ptr.vmem [resolvable:$true] %s337
          %343 = dma.hbm_to_vmem [thread:$0]  %s8, 2048, %s338, [#allocation9], 128, 128, 8
        $region44: #{tpu_custom_call.1} parent=11 // pred_fallthru
          _
        // Predicated region
        $region45: #{tpu_custom_call.1} parent=11 // pred_check
          %p344 = pneg %p239
        $region46: #{tpu_custom_call.1} parent=11 // pred_check_branch
          %346 = sbr.rel (%p344) target = $region48
        $region47: #{tpu_custom_call.1} parent=11 // pred_region
          _
        $region48: #{tpu_custom_call.1} parent=11 // pred_fallthru
          _
      $region12: #{tpu_custom_call.1} parent=5 // pred_fallthru
        _
      %p347 = scmp.lt.s32.totalorder %s24, 2
      // Predicated region
      $region49: #{tpu_custom_call.1} parent=5 // pred_check
        %p348 = pneg %p347
      $region50: #{tpu_custom_call.1} parent=5 // pred_check_branch
        %350 = sbr.rel (%p348) target = $region52
      $region51: #{tpu_custom_call.1} parent=5 // pred_region
        // Predicated region
        $region53: #{tpu_custom_call.1} parent=51 // pred_check
          %p351 = pneg %p44
        $region54: #{tpu_custom_call.1} parent=51 // pred_check_branch
          %353 = sbr.rel (%p351) target = $region56
        $region55: #{tpu_custom_call.1} parent=51 // pred_region
          %s354 = sand.u32 %s34, 1
          %s355 = scalar_lea.sflag [#allocation3], %s354
          %s356 = sand.u32 %s34, 1
          %s357 = smul.addr %s356, 8
          %s358 = scalar_lea.vmem [#allocation2], %s357
          %s360 = ssub.s32 128, 128
          %361 = vsyncadd %s355, %s360
          %s362 = smul.addr %s24, 128
          %s363 = scalar_lea.hbm %s0, %s362
          %s365 = sshll.u32 %s358, 4
          %s366 = int_to_ptr.vmem [resolvable:$true] %s365
          %368 = dma.hbm_to_vmem [thread:$0]  %s363, 128, %s366, %s355
        $region56: #{tpu_custom_call.1} parent=51 // pred_fallthru
          _
      $region52: #{tpu_custom_call.1} parent=5 // pred_fallthru
        _
      %p369 = scmp.le.s32.totalorder 1, %s24
      %p370 = scmp.lt.s32.totalorder %s24, 3
      %p371 = pnand %p369, %p370
      %p372 = pneg %p371
      // Predicated region
      $region57: #{tpu_custom_call.1} parent=5 // pred_check
        _
      $region58: #{tpu_custom_call.1} parent=5 // pred_check_branch
        %374 = sbr.rel (%p371) target = $region60
      $region59: #{tpu_custom_call.1} parent=5 // pred_region
        %s375 = ssub.s32 %s24, 1
        %s376 = sand.u32 %s37, 1
        %s377 = scalar_lea.sflag [#allocation3], %s376
        %s378 = sand.u32 %s37, 1
        %s379 = smul.addr %s378, 8
        %s380 = scalar_lea.vmem [#allocation2], %s379
        // Predicated region
        $region61: #{tpu_custom_call.1} parent=59 // pred_check
          %p381 = pneg %p50
        $region62: #{tpu_custom_call.1} parent=59 // pred_check_branch
          %383 = sbr.rel (%p381) target = $region64
        $region63: #{tpu_custom_call.1} parent=59 // pred_region
          %384 = dma.done %s377, 128
        $region64: #{tpu_custom_call.1} parent=59 // pred_fallthru
          _
        // Predicated region
        $region65: #{tpu_custom_call.1} parent=59 // pred_check
          %p385 = pneg %p71
        $region66: #{tpu_custom_call.1} parent=59 // pred_check_branch
          %387 = sbr.rel (%p385) target = $region68
        $region67: #{tpu_custom_call.1} parent=59 // pred_region
          %388 = dma.done [#allocation6], 12288
        $region68: #{tpu_custom_call.1} parent=59 // pred_fallthru
          _
        // Predicated region
        $region69: #{tpu_custom_call.1} parent=59 // pred_check
          %p389 = pneg %p92
        $region70: #{tpu_custom_call.1} parent=59 // pred_check_branch
          %391 = sbr.rel (%p389) target = $region72
        $region71: #{tpu_custom_call.1} parent=59 // pred_region
          %392 = dma.done [#allocation6], 4096
        $region72: #{tpu_custom_call.1} parent=59 // pred_fallthru
          _
        // Predicated region
        $region73: #{tpu_custom_call.1} parent=59 // pred_check
          %p393 = pneg %p176
        $region74: #{tpu_custom_call.1} parent=59 // pred_check_branch
          %395 = sbr.rel (%p393) target = $region76
        $region75: #{tpu_custom_call.1} parent=59 // pred_region
          %396 = dma.done [#allocation9], 2048
        $region76: #{tpu_custom_call.1} parent=59 // pred_fallthru
          _
        // Predicated region
        $region77: #{tpu_custom_call.1} parent=59 // pred_check
          %p397 = pneg %p218
        $region78: #{tpu_custom_call.1} parent=59 // pred_check_branch
          %399 = sbr.rel (%p397) target = $region80
        $region79: #{tpu_custom_call.1} parent=59 // pred_region
          %400 = dma.done [#allocation9], 2048
        $region80: #{tpu_custom_call.1} parent=59 // pred_fallthru
          _
        %s401 = sand.u32 %s37, 1
        %s402 = scalar_lea.sflag [#allocation3], %s401
        %s403 = sand.u32 %s37, 1
        %s404 = smul.addr %s403, 8
        %s405 = scalar_lea.vmem [#allocation2], %s404
        %p406 = pneg %p50
        %p407 = pneg %p47
        %p408 = pneg %p71
        %p409 = pneg %p68
        %p410 = pneg %p92
        %p411 = pneg %p89
        %p412 = pneg %p113
        %p413 = pneg %p110
        %p414 = pneg %p134
        %p415 = pneg %p131
        %p416 = pneg %p155
        %p417 = pneg %p152
        %p418 = pneg %p176
        %p419 = pneg %p173
        %p420 = pneg %p197
        %p421 = pneg %p194
        %p422 = pneg %p218
        %p423 = pneg %p215
        %p424 = pneg %p239
        %p425 = pneg %p236
        %p426 = pneg %p265
        %p427 = pneg %p262
        %s428 = sand.u32 %s252, 1
        %s429 = scalar_lea.sflag [#allocation4], %s428
        %s430 = sand.u32 %s252, 1
        %s431 = smul.addr %s430, 8
        %s432 = scalar_lea.vmem [#allocation11], %s431
        %v433 = vld [vmem:[%s380] sm:$0xff]
        %v434 = vld [vmem:[%s3] sm:$0x1]
        %v435 = vld [vmem:[%s4] sm:$0x1]
        %v436 = vld [vmem:[%s5] sm:$0x1]
        %v437 = vld [vmem:[%s7] sm:$0x1]
        %v438 = vld [vmem:[%s9] sm:$0x1]
        %v439 = vld [vmem:[#allocation5] sm:$0xff]
        %v440 = vld [vmem:[#allocation5 + $0x8] sm:$0xff]
        %v441 = vld [vmem:[#allocation5 + $0x10] sm:$0xff]
        %v442 = vld [vmem:[#allocation5 + $0x18] sm:$0xff]
        %v443 = vld [vmem:[#allocation5 + $0x20] sm:$0xff]
        %v444 = vld [vmem:[#allocation5 + $0x28] sm:$0xff]
        %v445 = vld [vmem:[#allocation5 + $0x30] sm:$0xff]
        %v446 = vld [vmem:[#allocation5 + $0x38] sm:$0xff]
        %v447 = vld [vmem:[#allocation5 + $0x40] sm:$0xff]
        %v448 = vld [vmem:[#allocation5 + $0x48] sm:$0xff]
        %v449 = vld [vmem:[#allocation5 + $0x50] sm:$0xff]
        %v450 = vld [vmem:[#allocation5 + $0x58] sm:$0xff]
        %v451 = vld [vmem:[#allocation5 + $0x60] sm:$0xff]
        %v452 = vld [vmem:[#allocation5 + $0x68] sm:$0xff]
        %v453 = vld [vmem:[#allocation5 + $0x70] sm:$0xff]
        %v454 = vld [vmem:[#allocation5 + $0x78] sm:$0xff]
        %v455 = vld [vmem:[#allocation5 + $0x80] sm:$0xff]
        %v456 = vld [vmem:[#allocation5 + $0x88] sm:$0xff]
        %v457 = vld [vmem:[#allocation5 + $0x90] sm:$0xff]
        %v458 = vld [vmem:[#allocation5 + $0x98] sm:$0xff]
        %v459 = vld [vmem:[#allocation5 + $0xa0] sm:$0xff]
        %v460 = vld [vmem:[#allocation5 + $0xa8] sm:$0xff]
        %v461 = vld [vmem:[#allocation5 + $0xb0] sm:$0xff]
        %v462 = vld [vmem:[#allocation5 + $0xb8] sm:$0xff]
        %v463 = vld [vmem:[#allocation5 + $0xc0] sm:$0xff]
        %v464 = vld [vmem:[#allocation5 + $0xc8] sm:$0xff]
        %v465 = vld [vmem:[#allocation5 + $0xd0] sm:$0xff]
        %v466 = vld [vmem:[#allocation5 + $0xd8] sm:$0xff]
        %v467 = vld [vmem:[#allocation5 + $0xe0] sm:$0xff]
        %v468 = vld [vmem:[#allocation5 + $0xe8] sm:$0xff]
        %v469 = vld [vmem:[#allocation5 + $0xf0] sm:$0xff]
        %v470 = vld [vmem:[#allocation5 + $0xf8] sm:$0xff]
        %v471 = vld [vmem:[#allocation5 + $0x100] sm:$0xff]
        %v472 = vld [vmem:[#allocation5 + $0x108] sm:$0xff]
        %v473 = vld [vmem:[#allocation5 + $0x110] sm:$0xff]
        %v474 = vld [vmem:[#allocation5 + $0x118] sm:$0xff]
        %v475 = vld [vmem:[#allocation5 + $0x120] sm:$0xff]
        %v476 = vld [vmem:[#allocation5 + $0x128] sm:$0xff]
        %v477 = vld [vmem:[#allocation5 + $0x130] sm:$0xff]
        %v478 = vld [vmem:[#allocation5 + $0x138] sm:$0xff]
        %v479 = vld [vmem:[#allocation5 + $0x140] sm:$0xff]
        %v480 = vld [vmem:[#allocation5 + $0x148] sm:$0xff]
        %v481 = vld [vmem:[#allocation5 + $0x150] sm:$0xff]
        %v482 = vld [vmem:[#allocation5 + $0x158] sm:$0xff]
        %v483 = vld [vmem:[#allocation5 + $0x160] sm:$0xff]
        %v484 = vld [vmem:[#allocation5 + $0x168] sm:$0xff]
        %v485 = vld [vmem:[#allocation5 + $0x170] sm:$0xff]
        %v486 = vld [vmem:[#allocation5 + $0x178] sm:$0xff]
        %v487 = vld [vmem:[#allocation5 + $0x180] sm:$0xff]
        %v488 = vld [vmem:[#allocation5 + $0x188] sm:$0xff]
        %v489 = vld [vmem:[#allocation5 + $0x190] sm:$0xff]
        %v490 = vld [vmem:[#allocation5 + $0x198] sm:$0xff]
        %v491 = vld [vmem:[#allocation5 + $0x1a0] sm:$0xff]
        %v492 = vld [vmem:[#allocation5 + $0x1a8] sm:$0xff]
        %v493 = vld [vmem:[#allocation5 + $0x1b0] sm:$0xff]
        %v494 = vld [vmem:[#allocation5 + $0x1b8] sm:$0xff]
        %v495 = vld [vmem:[#allocation5 + $0x1c0] sm:$0xff]
        %v496 = vld [vmem:[#allocation5 + $0x1c8] sm:$0xff]
        %v497 = vld [vmem:[#allocation5 + $0x1d0] sm:$0xff]
        %v498 = vld [vmem:[#allocation5 + $0x1d8] sm:$0xff]
        %v499 = vld [vmem:[#allocation5 + $0x1e0] sm:$0xff]
        %v500 = vld [vmem:[#allocation5 + $0x1e8] sm:$0xff]
        %v501 = vld [vmem:[#allocation5 + $0x1f0] sm:$0xff]
        %v502 = vld [vmem:[#allocation5 + $0x1f8] sm:$0xff]
        %v503 = vld [vmem:[#allocation5 + $0x200] sm:$0xff]
        %v504 = vld [vmem:[#allocation5 + $0x208] sm:$0xff]
        %v505 = vld [vmem:[#allocation5 + $0x210] sm:$0xff]
        %v506 = vld [vmem:[#allocation5 + $0x218] sm:$0xff]
        %v507 = vld [vmem:[#allocation5 + $0x220] sm:$0xff]
        %v508 = vld [vmem:[#allocation5 + $0x228] sm:$0xff]
        %v509 = vld [vmem:[#allocation5 + $0x230] sm:$0xff]
        %v510 = vld [vmem:[#allocation5 + $0x238] sm:$0xff]
        %v511 = vld [vmem:[#allocation5 + $0x240] sm:$0xff]
        %v512 = vld [vmem:[#allocation5 + $0x248] sm:$0xff]
        %v513 = vld [vmem:[#allocation5 + $0x250] sm:$0xff]
        %v514 = vld [vmem:[#allocation5 + $0x258] sm:$0xff]
        %v515 = vld [vmem:[#allocation5 + $0x260] sm:$0xff]
        %v516 = vld [vmem:[#allocation5 + $0x268] sm:$0xff]
        %v517 = vld [vmem:[#allocation5 + $0x270] sm:$0xff]
        %v518 = vld [vmem:[#allocation5 + $0x278] sm:$0xff]
        %v519 = vld [vmem:[#allocation5 + $0x280] sm:$0xff]
        %v520 = vld [vmem:[#allocation5 + $0x288] sm:$0xff]
        %v521 = vld [vmem:[#allocation5 + $0x290] sm:$0xff]
        %v522 = vld [vmem:[#allocation5 + $0x298] sm:$0xff]
        %v523 = vld [vmem:[#allocation5 + $0x2a0] sm:$0xff]
        %v524 = vld [vmem:[#allocation5 + $0x2a8] sm:$0xff]
        %v525 = vld [vmem:[#allocation5 + $0x2b0] sm:$0xff]
        %v526 = vld [vmem:[#allocation5 + $0x2b8] sm:$0xff]
        %v527 = vld [vmem:[#allocation5 + $0x2c0] sm:$0xff]
        %v528 = vld [vmem:[#allocation5 + $0x2c8] sm:$0xff]
        %v529 = vld [vmem:[#allocation5 + $0x2d0] sm:$0xff]
        %v530 = vld [vmem:[#allocation5 + $0x2d8] sm:$0xff]
        %v531 = vld [vmem:[#allocation5 + $0x2e0] sm:$0xff]
        %v532 = vld [vmem:[#allocation5 + $0x2e8] sm:$0xff]
        %v533 = vld [vmem:[#allocation5 + $0x2f0] sm:$0xff]
        %v534 = vld [vmem:[#allocation5 + $0x2f8] sm:$0xff]
        %535 = vmatprep.subr.mxu0 %v530
        %536 = vmatpush1.msra.mxu0 %v529
        %537 = vmatprep.subr.mxu0 %v524
        %538 = vmatpush1.msra.mxu0 %v523
        %539 = vmatprep.subr.mxu0 %v518
        %540 = vmatpush1.msra.mxu0 %v517
        %541 = vmatprep.subr.mxu0 %v512
        %542 = vmatpush1.msra.mxu0 %v511
        %543 = vmatprep.subr.mxu0 %v506
        %544 = vmatpush1.msra.mxu0 %v505
        %545 = vmatprep.subr.mxu0 %v500
        %546 = vmatpush1.msra.mxu0 %v499
        %547 = vmatprep.subr.mxu0 %v494
        %548 = vmatpush1.msra.mxu0 %v493
        %549 = vmatprep.subr.mxu0 %v488
        %550 = vmatpush1.msra.mxu0 %v487
        %551 = vmatprep.subr.mxu0 %v482
        %552 = vmatpush1.msra.mxu0 %v481
        %553 = vmatprep.subr.mxu0 %v476
        %554 = vmatpush1.msra.mxu0 %v475
        %555 = vmatprep.subr.mxu0 %v470
        %556 = vmatpush1.msra.mxu0 %v469
        %557 = vmatprep.subr.mxu0 %v464
        %558 = vmatpush1.msra.mxu0 %v463
        %559 = vmatprep.subr.mxu0 %v458
        %560 = vmatpush1.msra.mxu0 %v457
        %561 = vmatprep.subr.mxu0 %v452
        %562 = vmatpush1.msra.mxu0 %v451
        %563 = vmatprep.subr.mxu0 %v446
        %564 = vmatpush1.msra.mxu0 %v445
        %565 = vmatprep.subr.mxu0 %v440
        %566 = vmatpush1.msra.mxu0 %v439
        %567 = vmatprep.subr.mxu0 0.0
        %568 = vmatpush2.msra.mxu0 0.0
        %569 = vmatprep.subr.mxu0 0.0
        %570 = vmatpush2.msra.mxu0 0.0
        %571 = vmatprep.subr.mxu0 0.0
        %572 = vmatpush2.msra.mxu0 0.0
        %573 = vmatprep.subr.mxu0 0.0
        %574 = vmatpush2.msra.mxu0 0.0
        %575 = vmatprep.subr.mxu0 0.0
        %576 = vmatpush2.msra.mxu0 0.0
        %577 = vmatprep.subr.mxu0 0.0
        %578 = vmatpush2.msra.mxu0 0.0
        %579 = vmatprep.subr.mxu0 0.0
        %580 = vmatpush2.msra.mxu0 0.0
        %581 = vmatprep.subr.mxu0 0.0
        %582 = vmatpush2.msra.mxu0 0.0
        %583 = vmatprep.subr.mxu0 0.0
        %584 = vmatpush2.msra.mxu0 0.0
        %585 = vmatprep.subr.mxu0 0.0
        %586 = vmatpush2.msra.mxu0 0.0
        %587 = vmatprep.subr.mxu0 0.0
        %588 = vmatpush2.msra.mxu0 0.0
        %589 = vmatprep.subr.mxu0 0.0
        %590 = vmatpush2.msra.mxu0 0.0
        %591 = vmatprep.subr.mxu0 0.0
        %592 = vmatpush2.msra.mxu0 0.0
        %593 = vmatprep.subr.mxu0 0.0
        %594 = vmatpush2.msra.mxu0 0.0
        %595 = vmatprep.subr.mxu0 0.0
        %596 = vmatpush2.msra.mxu0 0.0
        %597 = vmatprep.subr.mxu0 0.0
        %598 = vmatpush2.msra.mxu0 0.0
        %599 = vmatprep.mubr.f32.mxu0 0.0
        %600 = vmatmul.mubr.f32.gmra.mxu0 %v433
        %v601 = vpop.f32.mrf.mxu0
        %v602 = vadd.f32 0.0, %v601
        %v603 = vpop.f32.mrf.mxu0
        %v604 = vadd.f32 0.0, %v603
        %605 = vdwg.mxu0
        %606 = vmatprep.subr.mxu0 %v532
        %607 = vmatpush1.msra.mxu0 %v531
        %608 = vmatprep.subr.mxu0 %v526
        %609 = vmatpush1.msra.mxu0 %v525
        %610 = vmatprep.subr.mxu0 %v520
        %611 = vmatpush1.msra.mxu0 %v519
        %612 = vmatprep.subr.mxu0 %v514
        %613 = vmatpush1.msra.mxu0 %v513
        %614 = vmatprep.subr.mxu0 %v508
        %615 = vmatpush1.msra.mxu0 %v507
        %616 = vmatprep.subr.mxu0 %v502
        %617 = vmatpush1.msra.mxu0 %v501
        %618 = vmatprep.subr.mxu0 %v496
        %619 = vmatpush1.msra.mxu0 %v495
        %620 = vmatprep.subr.mxu0 %v490
        %621 = vmatpush1.msra.mxu0 %v489
        %622 = vmatprep.subr.mxu0 %v484
        %623 = vmatpush1.msra.mxu0 %v483
        %624 = vmatprep.subr.mxu0 %v478
        %625 = vmatpush1.msra.mxu0 %v477
        %626 = vmatprep.subr.mxu0 %v472
        %627 = vmatpush1.msra.mxu0 %v471
        %628 = vmatprep.subr.mxu0 %v466
        %629 = vmatpush1.msra.mxu0 %v465
        %630 = vmatprep.subr.mxu0 %v460
        %631 = vmatpush1.msra.mxu0 %v459
        %632 = vmatprep.subr.mxu0 %v454
        %633 = vmatpush1.msra.mxu0 %v453
        %634 = vmatprep.subr.mxu0 %v448
        %635 = vmatpush1.msra.mxu0 %v447
        %636 = vmatprep.subr.mxu0 %v442
        %637 = vmatpush1.msra.mxu0 %v441
        %638 = vmatprep.subr.mxu0 0.0
        %639 = vmatpush2.msra.mxu0 0.0
        %640 = vmatprep.subr.mxu0 0.0
        %641 = vmatpush2.msra.mxu0 0.0
        %642 = vmatprep.subr.mxu0 0.0
        %643 = vmatpush2.msra.mxu0 0.0
        %644 = vmatprep.subr.mxu0 0.0
        %645 = vmatpush2.msra.mxu0 0.0
        %646 = vmatprep.subr.mxu0 0.0
        %647 = vmatpush2.msra.mxu0 0.0
        %648 = vmatprep.subr.mxu0 0.0
        %649 = vmatpush2.msra.mxu0 0.0
        %650 = vmatprep.subr.mxu0 0.0
        %651 = vmatpush2.msra.mxu0 0.0
        %652 = vmatprep.subr.mxu0 0.0
        %653 = vmatpush2.msra.mxu0 0.0
        %654 = vmatprep.subr.mxu0 0.0
        %655 = vmatpush2.msra.mxu0 0.0
        %656 = vmatprep.subr.mxu0 0.0
        %657 = vmatpush2.msra.mxu0 0.0
        %658 = vmatprep.subr.mxu0 0.0
        %659 = vmatpush2.msra.mxu0 0.0
        %660 = vmatprep.subr.mxu0 0.0
        %661 = vmatpush2.msra.mxu0 0.0
        %662 = vmatprep.subr.mxu0 0.0
        %663 = vmatpush2.msra.mxu0 0.0
        %664 = vmatprep.subr.mxu0 0.0
        %665 = vmatpush2.msra.mxu0 0.0
        %666 = vmatprep.subr.mxu0 0.0
        %667 = vmatpush2.msra.mxu0 0.0
        %668 = vmatprep.subr.mxu0 0.0
        %669 = vmatpush2.msra.mxu0 0.0
        %670 = vmatprep.mubr.f32.mxu0 0.0
        %671 = vmatmul.mubr.f32.gmra.mxu0 %v433
        %v672 = vpop.f32.mrf.mxu0
        %v673 = vadd.f32 0.0, %v672
        %v674 = vpop.f32.mrf.mxu0
        %v675 = vadd.f32 0.0, %v674
        %676 = vdwg.mxu0
        %677 = vmatprep.subr.mxu0 %v534
        %678 = vmatpush1.msra.mxu0 %v533
        %679 = vmatprep.subr.mxu0 %v528
        %680 = vmatpush1.msra.mxu0 %v527
        %681 = vmatprep.subr.mxu0 %v522
        %682 = vmatpush1.msra.mxu0 %v521
        %683 = vmatprep.subr.mxu0 %v516
        %684 = vmatpush1.msra.mxu0 %v515
        %685 = vmatprep.subr.mxu0 %v510
        %686 = vmatpush1.msra.mxu0 %v509
        %687 = vmatprep.subr.mxu0 %v504
        %688 = vmatpush1.msra.mxu0 %v503
        %689 = vmatprep.subr.mxu0 %v498
        %690 = vmatpush1.msra.mxu0 %v497
        %691 = vmatprep.subr.mxu0 %v492
        %692 = vmatpush1.msra.mxu0 %v491
        %693 = vmatprep.subr.mxu0 %v486
        %694 = vmatpush1.msra.mxu0 %v485
        %695 = vmatprep.subr.mxu0 %v480
        %696 = vmatpush1.msra.mxu0 %v479
        %697 = vmatprep.subr.mxu0 %v474
        %698 = vmatpush1.msra.mxu0 %v473
        %699 = vmatprep.subr.mxu0 %v468
        %700 = vmatpush1.msra.mxu0 %v467
        %701 = vmatprep.subr.mxu0 %v462
        %702 = vmatpush1.msra.mxu0 %v461
        %703 = vmatprep.subr.mxu0 %v456
        %704 = vmatpush1.msra.mxu0 %v455
        %705 = vmatprep.subr.mxu0 %v450
        %706 = vmatpush1.msra.mxu0 %v449
        %707 = vmatprep.subr.mxu0 %v444
        %708 = vmatpush1.msra.mxu0 %v443
        %709 = vmatprep.subr.mxu0 0.0
        %710 = vmatpush2.msra.mxu0 0.0
        %711 = vmatprep.subr.mxu0 0.0
        %712 = vmatpush2.msra.mxu0 0.0
        %713 = vmatprep.subr.mxu0 0.0
        %714 = vmatpush2.msra.mxu0 0.0
        %715 = vmatprep.subr.mxu0 0.0
        %716 = vmatpush2.msra.mxu0 0.0
        %717 = vmatprep.subr.mxu0 0.0
        %718 = vmatpush2.msra.mxu0 0.0
        %719 = vmatprep.subr.mxu0 0.0
        %720 = vmatpush2.msra.mxu0 0.0
        %721 = vmatprep.subr.mxu0 0.0
        %722 = vmatpush2.msra.mxu0 0.0
        %723 = vmatprep.subr.mxu0 0.0
        %724 = vmatpush2.msra.mxu0 0.0
        %725 = vmatprep.subr.mxu0 0.0
        %726 = vmatpush2.msra.mxu0 0.0
        %727 = vmatprep.subr.mxu0 0.0
        %728 = vmatpush2.msra.mxu0 0.0
        %729 = vmatprep.subr.mxu0 0.0
        %730 = vmatpush2.msra.mxu0 0.0
        %731 = vmatprep.subr.mxu0 0.0
        %732 = vmatpush2.msra.mxu0 0.0
        %733 = vmatprep.subr.mxu0 0.0
        %734 = vmatpush2.msra.mxu0 0.0
        %735 = vmatprep.subr.mxu0 0.0
        %736 = vmatpush2.msra.mxu0 0.0
        %737 = vmatprep.subr.mxu0 0.0
        %738 = vmatpush2.msra.mxu0 0.0
        %739 = vmatprep.subr.mxu0 0.0
        %740 = vmatpush2.msra.mxu0 0.0
        %741 = vmatprep.mubr.f32.mxu0 0.0
        %742 = vmatmul.mubr.f32.gmra.mxu0 %v433
        %v743 = vpop.f32.mrf.mxu0
        %v744 = vadd.f32 0.0, %v743
        %v745 = vpop.f32.mrf.mxu0
        %v746 = vadd.f32 0.0, %v745
        %747 = vdwg.mxu0
        %748 = vmatprep.subr.mxu0 0.0
        %749 = vmatpush1.xpose.msra.mxu0 0.0
        %750 = vmatprep.subr.mxu0 0.0
        %751 = vmatpush1.xpose.msra.mxu0 0.0
        %752 = vmatprep.subr.mxu0 0.0
        %753 = vmatpush1.xpose.msra.mxu0 0.0
        %754 = vmatprep.subr.mxu0 0.0
        %755 = vmatpush1.xpose.msra.mxu0 0.0
        %756 = vmatprep.subr.mxu0 0.0
        %757 = vmatpush1.xpose.msra.mxu0 0.0
        %758 = vmatprep.subr.mxu0 0.0
        %759 = vmatpush1.xpose.msra.mxu0 0.0
        %760 = vmatprep.subr.mxu0 0.0
        %761 = vmatpush1.xpose.msra.mxu0 0.0
        %762 = vmatprep.subr.mxu0 0.0
        %763 = vmatpush1.xpose.msra.mxu0 0.0
        %764 = vmatprep.subr.mxu0 0.0
        %765 = vmatpush1.xpose.msra.mxu0 0.0
        %766 = vmatprep.subr.mxu0 0.0
        %767 = vmatpush1.xpose.msra.mxu0 0.0
        %768 = vmatprep.subr.mxu0 0.0
        %769 = vmatpush1.xpose.msra.mxu0 0.0
        %770 = vmatprep.subr.mxu0 0.0
        %771 = vmatpush1.xpose.msra.mxu0 0.0
        %772 = vmatprep.subr.mxu0 0.0
        %773 = vmatpush1.xpose.msra.mxu0 0.0
        %774 = vmatprep.subr.mxu0 0.0
        %775 = vmatpush1.xpose.msra.mxu0 0.0
        %776 = vmatprep.subr.mxu0 0.0
        %777 = vmatpush1.xpose.msra.mxu0 0.0
        %778 = vmatprep.subr.mxu0 0.0
        %779 = vmatpush1.xpose.msra.mxu0 %v602
        %780 = vmatprep.subr.mxu0 0.0
        %781 = vmatpush2.xpose.msra.mxu0 0.0
        %782 = vmatprep.subr.mxu0 0.0
        %783 = vmatpush2.xpose.msra.mxu0 0.0
        %784 = vmatprep.subr.mxu0 0.0
        %785 = vmatpush2.xpose.msra.mxu0 0.0
        %786 = vmatprep.subr.mxu0 0.0
        %787 = vmatpush2.xpose.msra.mxu0 0.0
        %788 = vmatprep.subr.mxu0 0.0
        %789 = vmatpush2.xpose.msra.mxu0 0.0
        %790 = vmatprep.subr.mxu0 0.0
        %791 = vmatpush2.xpose.msra.mxu0 0.0
        %792 = vmatprep.subr.mxu0 0.0
        %793 = vmatpush2.xpose.msra.mxu0 0.0
        %794 = vmatprep.subr.mxu0 0.0
        %795 = vmatpush2.xpose.msra.mxu0 0.0
        %796 = vmatprep.subr.mxu0 0.0
        %797 = vmatpush2.xpose.msra.mxu0 0.0
        %798 = vmatprep.subr.mxu0 0.0
        %799 = vmatpush2.xpose.msra.mxu0 0.0
        %800 = vmatprep.subr.mxu0 0.0
        %801 = vmatpush2.xpose.msra.mxu0 0.0
        %802 = vmatprep.subr.mxu0 0.0
        %803 = vmatpush2.xpose.msra.mxu0 0.0
        %804 = vmatprep.subr.mxu0 0.0
        %805 = vmatpush2.xpose.msra.mxu0 0.0
        %806 = vmatprep.subr.mxu0 0.0
        %807 = vmatpush2.xpose.msra.mxu0 0.0
        %808 = vmatprep.subr.mxu0 0.0
        %809 = vmatpush2.xpose.msra.mxu0 0.0
        %810 = vmatprep.subr.mxu0 0.0
        %811 = vmatpush2.xpose.msra.mxu0 0.0
        %812 = vmatprep.mubr.f32.mxu0 0.0
        %813 = vmatmul.mubr.f32.gmra.mxu0 %v673
        %v814 = vpop.f32.mrf.mxu0
        %v815 = vadd.f32 0.0, %v814
        %v816 = vpop.f32.mrf.mxu0
        %817 = vdwg.mxu0
        %vm818 = vcmask 64512
        %v819 = vsel %vm818, %v815, -inf
        %820 = vmax.xlane.f32.xlu0 %v819
        %v821 = vpop.xlane.xlu0 %820
        %v822 = vsub.f32 %v815, %v821
        %v823 = vmul.f32 %v822, 1.442695
        %v824 = vpow.pop %v823
        %v825 = vsel %vm818, %v824, 0.0
        %826 = vadd.xlane.f32.xlu0 %v825
        %v827 = vpop.xlane.xlu0 %826
        %v828 = vrcp.pop %v827
        %v829 = vmul.f32 %v828, 0.25
        %v830 = vmul.f32 %v824, %v829
        %831 = vxpose.xlu0.b32.start [1/16] %v830, 128
        %832 = vxpose.xlu0.b32.cont [2/16] 0.0, 128
        %833 = vxpose.xlu0.b32.cont [3/16] 0.0, 128
        %834 = vxpose.xlu0.b32.cont [4/16] 0.0, 128
        %835 = vxpose.xlu0.b32.cont [5/16] 0.0, 128
        %836 = vxpose.xlu0.b32.cont [6/16] 0.0, 128
        %837 = vxpose.xlu0.b32.cont [7/16] 0.0, 128
        %838 = vxpose.xlu0.b32.cont [8/16] 0.0, 128
        %839 = vxpose.xlu0.b32.cont [9/16] 0.0, 128
        %840 = vxpose.xlu0.b32.cont [10/16] 0.0, 128
        %841 = vxpose.xlu0.b32.cont [11/16] 0.0, 128
        %842 = vxpose.xlu0.b32.cont [12/16] 0.0, 128
        %843 = vxpose.xlu0.b32.cont [13/16] 0.0, 128
        %844 = vxpose.xlu0.b32.cont [14/16] 0.0, 128
        %845 = vxpose.xlu0.b32.cont [15/16] 0.0, 128
        %846 = vxpose.xlu0.b32.end [16/16] 0.0, 128
        %v847 = vpop.trf.xlu0
        %v848 = vpop.trf.xlu0
        %v849 = vpop.trf.xlu0
        %v850 = vpop.trf.xlu0
        %v851 = vpop.trf.xlu0
        %v852 = vpop.trf.xlu0
        %v853 = vpop.trf.xlu0
        %v854 = vpop.trf.xlu0
        %v855 = vpop.trf.xlu0
        %v856 = vpop.trf.xlu0
        %v857 = vpop.trf.xlu0
        %v858 = vpop.trf.xlu0
        %v859 = vpop.trf.xlu0
        %v860 = vpop.trf.xlu0
        %v861 = vpop.trf.xlu0
        %v862 = vpop.trf.xlu0
        %v864 = vsel %vm818, %v847, 0
        %866 = vmatprep.subr.mxu0 0.0
        %867 = vmatpush1.msra.mxu0 0.0
        %868 = vmatprep.subr.mxu0 0.0
        %869 = vmatpush1.msra.mxu0 0.0
        %870 = vmatprep.subr.mxu0 0.0
        %871 = vmatpush1.msra.mxu0 0.0
        %872 = vmatprep.subr.mxu0 0.0
        %873 = vmatpush1.msra.mxu0 0.0
        %874 = vmatprep.subr.mxu0 0.0
        %875 = vmatpush1.msra.mxu0 0.0
        %876 = vmatprep.subr.mxu0 0.0
        %877 = vmatpush1.msra.mxu0 0.0
        %878 = vmatprep.subr.mxu0 0.0
        %879 = vmatpush1.msra.mxu0 0.0
        %880 = vmatprep.subr.mxu0 0.0
        %881 = vmatpush1.msra.mxu0 0.0
        %882 = vmatprep.subr.mxu0 0.0
        %883 = vmatpush1.msra.mxu0 0.0
        %884 = vmatprep.subr.mxu0 0.0
        %885 = vmatpush1.msra.mxu0 0.0
        %886 = vmatprep.subr.mxu0 0.0
        %887 = vmatpush1.msra.mxu0 0.0
        %888 = vmatprep.subr.mxu0 0.0
        %889 = vmatpush1.msra.mxu0 0.0
        %890 = vmatprep.subr.mxu0 0.0
        %891 = vmatpush1.msra.mxu0 0.0
        %892 = vmatprep.subr.mxu0 0.0
        %893 = vmatpush1.msra.mxu0 0.0
        %894 = vmatprep.subr.mxu0 0.0
        %895 = vmatpush1.msra.mxu0 0.0
        %896 = vmatprep.subr.mxu0 0.0
        %897 = vmatpush1.msra.mxu0 %v744
        %898 = vmatprep.subr.mxu0 0.0
        %899 = vmatpush2.msra.mxu0 0.0
        %900 = vmatprep.subr.mxu0 0.0
        %901 = vmatpush2.msra.mxu0 0.0
        %902 = vmatprep.subr.mxu0 0.0
        %903 = vmatpush2.msra.mxu0 0.0
        %904 = vmatprep.subr.mxu0 0.0
        %905 = vmatpush2.msra.mxu0 0.0
        %906 = vmatprep.subr.mxu0 0.0
        %907 = vmatpush2.msra.mxu0 0.0
        %908 = vmatprep.subr.mxu0 0.0
        %909 = vmatpush2.msra.mxu0 0.0
        %910 = vmatprep.subr.mxu0 0.0
        %911 = vmatpush2.msra.mxu0 0.0
        %912 = vmatprep.subr.mxu0 0.0
        %913 = vmatpush2.msra.mxu0 0.0
        %914 = vmatprep.subr.mxu0 0.0
        %915 = vmatpush2.msra.mxu0 0.0
        %916 = vmatprep.subr.mxu0 0.0
        %917 = vmatpush2.msra.mxu0 0.0
        %918 = vmatprep.subr.mxu0 0.0
        %919 = vmatpush2.msra.mxu0 0.0
        %920 = vmatprep.subr.mxu0 0.0
        %921 = vmatpush2.msra.mxu0 0.0
        %922 = vmatprep.subr.mxu0 0.0
        %923 = vmatpush2.msra.mxu0 0.0
        %924 = vmatprep.subr.mxu0 0.0
        %925 = vmatpush2.msra.mxu0 0.0
        %926 = vmatprep.subr.mxu0 0.0
        %927 = vmatpush2.msra.mxu0 0.0
        %928 = vmatprep.subr.mxu0 0.0
        %929 = vmatpush2.msra.mxu0 0.0
        %930 = vmatprep.mubr.f32.mxu0 0.0
        %931 = vmatmul.mubr.f32.gmra.mxu0 %v864
        %v932 = vpop.f32.mrf.mxu0
        %v933 = vadd.f32 0.0, %v932
        %v934 = vpop.f32.mrf.mxu0
        %935 = vdwg.mxu0
        %936 = vmatprep.subr.mxu0 0.0
        %937 = vmatpush1.xpose.msra.mxu0 0.0
        %938 = vmatprep.subr.mxu0 0.0
        %939 = vmatpush1.xpose.msra.mxu0 0.0
        %940 = vmatprep.subr.mxu0 0.0
        %941 = vmatpush1.xpose.msra.mxu0 0.0
        %942 = vmatprep.subr.mxu0 0.0
        %943 = vmatpush1.xpose.msra.mxu0 0.0
        %944 = vmatprep.subr.mxu0 0.0
        %945 = vmatpush1.xpose.msra.mxu0 0.0
        %946 = vmatprep.subr.mxu0 0.0
        %947 = vmatpush1.xpose.msra.mxu0 0.0
        %948 = vmatprep.subr.mxu0 0.0
        %949 = vmatpush1.xpose.msra.mxu0 0.0
        %950 = vmatprep.subr.mxu0 0.0
        %951 = vmatpush1.xpose.msra.mxu0 0.0
        %952 = vmatprep.subr.mxu0 0.0
        %953 = vmatpush1.xpose.msra.mxu0 0.0
        %954 = vmatprep.subr.mxu0 0.0
        %955 = vmatpush1.xpose.msra.mxu0 0.0
        %956 = vmatprep.subr.mxu0 0.0
        %957 = vmatpush1.xpose.msra.mxu0 0.0
        %958 = vmatprep.subr.mxu0 0.0
        %959 = vmatpush1.xpose.msra.mxu0 0.0
        %960 = vmatprep.subr.mxu0 0.0
        %961 = vmatpush1.xpose.msra.mxu0 0.0
        %962 = vmatprep.subr.mxu0 0.0
        %963 = vmatpush1.xpose.msra.mxu0 0.0
        %964 = vmatprep.subr.mxu0 0.0
        %965 = vmatpush1.xpose.msra.mxu0 0.0
        %966 = vmatprep.subr.mxu0 0.0
        %967 = vmatpush1.xpose.msra.mxu0 %v604
        %968 = vmatprep.subr.mxu0 0.0
        %969 = vmatpush2.xpose.msra.mxu0 0.0
        %970 = vmatprep.subr.mxu0 0.0
        %971 = vmatpush2.xpose.msra.mxu0 0.0
        %972 = vmatprep.subr.mxu0 0.0
        %973 = vmatpush2.xpose.msra.mxu0 0.0
        %974 = vmatprep.subr.mxu0 0.0
        %975 = vmatpush2.xpose.msra.mxu0 0.0
        %976 = vmatprep.subr.mxu0 0.0
        %977 = vmatpush2.xpose.msra.mxu0 0.0
        %978 = vmatprep.subr.mxu0 0.0
        %979 = vmatpush2.xpose.msra.mxu0 0.0
        %980 = vmatprep.subr.mxu0 0.0
        %981 = vmatpush2.xpose.msra.mxu0 0.0
        %982 = vmatprep.subr.mxu0 0.0
        %983 = vmatpush2.xpose.msra.mxu0 0.0
        %984 = vmatprep.subr.mxu0 0.0
        %985 = vmatpush2.xpose.msra.mxu0 0.0
        %986 = vmatprep.subr.mxu0 0.0
        %987 = vmatpush2.xpose.msra.mxu0 0.0
        %988 = vmatprep.subr.mxu0 0.0
        %989 = vmatpush2.xpose.msra.mxu0 0.0
        %990 = vmatprep.subr.mxu0 0.0
        %991 = vmatpush2.xpose.msra.mxu0 0.0
        %992 = vmatprep.subr.mxu0 0.0
        %993 = vmatpush2.xpose.msra.mxu0 0.0
        %994 = vmatprep.subr.mxu0 0.0
        %995 = vmatpush2.xpose.msra.mxu0 0.0
        %996 = vmatprep.subr.mxu0 0.0
        %997 = vmatpush2.xpose.msra.mxu0 0.0
        %998 = vmatprep.subr.mxu0 0.0
        %999 = vmatpush2.xpose.msra.mxu0 0.0
        %1000 = vmatprep.mubr.f32.mxu0 0.0
        %1001 = vmatmul.mubr.f32.gmra.mxu0 %v675
        %v1002 = vpop.f32.mrf.mxu0
        %v1003 = vadd.f32 0.0, %v1002
        %v1004 = vpop.f32.mrf.mxu0
        %1005 = vdwg.mxu0
        %v1006 = vsel %vm818, %v1003, -inf
        %1007 = vmax.xlane.f32.xlu0 %v1006
        %v1008 = vpop.xlane.xlu0 %1007
        %v1009 = vsub.f32 %v1003, %v1008
        %v1010 = vmul.f32 %v1009, 1.442695
        %v1011 = vpow.pop %v1010
        %v1012 = vsel %vm818, %v1011, 0.0
        %1013 = vadd.xlane.f32.xlu0 %v1012
        %v1014 = vpop.xlane.xlu0 %1013
        %v1015 = vrcp.pop %v1014
        %v1016 = vmul.f32 %v1015, 0.25
        %v1017 = vmul.f32 %v1011, %v1016
        %1018 = vxpose.xlu0.b32.start [1/16] %v1017, 128
        %1019 = vxpose.xlu0.b32.cont [2/16] 0.0, 128
        %1020 = vxpose.xlu0.b32.cont [3/16] 0.0, 128
        %1021 = vxpose.xlu0.b32.cont [4/16] 0.0, 128
        %1022 = vxpose.xlu0.b32.cont [5/16] 0.0, 128
        %1023 = vxpose.xlu0.b32.cont [6/16] 0.0, 128
        %1024 = vxpose.xlu0.b32.cont [7/16] 0.0, 128
        %1025 = vxpose.xlu0.b32.cont [8/16] 0.0, 128
        %1026 = vxpose.xlu0.b32.cont [9/16] 0.0, 128
        %1027 = vxpose.xlu0.b32.cont [10/16] 0.0, 128
        %1028 = vxpose.xlu0.b32.cont [11/16] 0.0, 128
        %1029 = vxpose.xlu0.b32.cont [12/16] 0.0, 128
        %1030 = vxpose.xlu0.b32.cont [13/16] 0.0, 128
        %1031 = vxpose.xlu0.b32.cont [14/16] 0.0, 128
        %1032 = vxpose.xlu0.b32.cont [15/16] 0.0, 128
        %1033 = vxpose.xlu0.b32.end [16/16] 0.0, 128
        %v1034 = vpop.trf.xlu0
        %v1035 = vpop.trf.xlu0
        %v1036 = vpop.trf.xlu0
        %v1037 = vpop.trf.xlu0
        %v1038 = vpop.trf.xlu0
        %v1039 = vpop.trf.xlu0
        %v1040 = vpop.trf.xlu0
        %v1041 = vpop.trf.xlu0
        %v1042 = vpop.trf.xlu0
        %v1043 = vpop.trf.xlu0
        %v1044 = vpop.trf.xlu0
        %v1045 = vpop.trf.xlu0
        %v1046 = vpop.trf.xlu0
        %v1047 = vpop.trf.xlu0
        %v1048 = vpop.trf.xlu0
        %v1049 = vpop.trf.xlu0
        %v1051 = vsel %vm818, %v1034, 0
        %1053 = vmatprep.subr.mxu0 0.0
        %1054 = vmatpush1.msra.mxu0 0.0
        %1055 = vmatprep.subr.mxu0 0.0
        %1056 = vmatpush1.msra.mxu0 0.0
        %1057 = vmatprep.subr.mxu0 0.0
        %1058 = vmatpush1.msra.mxu0 0.0
        %1059 = vmatprep.subr.mxu0 0.0
        %1060 = vmatpush1.msra.mxu0 0.0
        %1061 = vmatprep.subr.mxu0 0.0
        %1062 = vmatpush1.msra.mxu0 0.0
        %1063 = vmatprep.subr.mxu0 0.0
        %1064 = vmatpush1.msra.mxu0 0.0
        %1065 = vmatprep.subr.mxu0 0.0
        %1066 = vmatpush1.msra.mxu0 0.0
        %1067 = vmatprep.subr.mxu0 0.0
        %1068 = vmatpush1.msra.mxu0 0.0
        %1069 = vmatprep.subr.mxu0 0.0
        %1070 = vmatpush1.msra.mxu0 0.0
        %1071 = vmatprep.subr.mxu0 0.0
        %1072 = vmatpush1.msra.mxu0 0.0
        %1073 = vmatprep.subr.mxu0 0.0
        %1074 = vmatpush1.msra.mxu0 0.0
        %1075 = vmatprep.subr.mxu0 0.0
        %1076 = vmatpush1.msra.mxu0 0.0
        %1077 = vmatprep.subr.mxu0 0.0
        %1078 = vmatpush1.msra.mxu0 0.0
        %1079 = vmatprep.subr.mxu0 0.0
        %1080 = vmatpush1.msra.mxu0 0.0
        %1081 = vmatprep.subr.mxu0 0.0
        %1082 = vmatpush1.msra.mxu0 0.0
        %1083 = vmatprep.subr.mxu0 0.0
        %1084 = vmatpush1.msra.mxu0 %v746
        %1085 = vmatprep.subr.mxu0 0.0
        %1086 = vmatpush2.msra.mxu0 0.0
        %1087 = vmatprep.subr.mxu0 0.0
        %1088 = vmatpush2.msra.mxu0 0.0
        %1089 = vmatprep.subr.mxu0 0.0
        %1090 = vmatpush2.msra.mxu0 0.0
        %1091 = vmatprep.subr.mxu0 0.0
        %1092 = vmatpush2.msra.mxu0 0.0
        %1093 = vmatprep.subr.mxu0 0.0
        %1094 = vmatpush2.msra.mxu0 0.0
        %1095 = vmatprep.subr.mxu0 0.0
        %1096 = vmatpush2.msra.mxu0 0.0
        %1097 = vmatprep.subr.mxu0 0.0
        %1098 = vmatpush2.msra.mxu0 0.0
        %1099 = vmatprep.subr.mxu0 0.0
        %1100 = vmatpush2.msra.mxu0 0.0
        %1101 = vmatprep.subr.mxu0 0.0
        %1102 = vmatpush2.msra.mxu0 0.0
        %1103 = vmatprep.subr.mxu0 0.0
        %1104 = vmatpush2.msra.mxu0 0.0
        %1105 = vmatprep.subr.mxu0 0.0
        %1106 = vmatpush2.msra.mxu0 0.0
        %1107 = vmatprep.subr.mxu0 0.0
        %1108 = vmatpush2.msra.mxu0 0.0
        %1109 = vmatprep.subr.mxu0 0.0
        %1110 = vmatpush2.msra.mxu0 0.0
        %1111 = vmatprep.subr.mxu0 0.0
        %1112 = vmatpush2.msra.mxu0 0.0
        %1113 = vmatprep.subr.mxu0 0.0
        %1114 = vmatpush2.msra.mxu0 0.0
        %1115 = vmatprep.subr.mxu0 0.0
        %1116 = vmatpush2.msra.mxu0 0.0
        %1117 = vmatprep.mubr.f32.mxu0 0.0
        %1118 = vmatmul.mubr.f32.gmra.mxu0 %v1051
        %v1119 = vpop.f32.mrf.mxu0
        %v1120 = vadd.f32 0.0, %v1119
        %v1121 = vpop.f32.mrf.mxu0
        %1122 = vdwg.mxu0
        %v1123 = vld [vmem:[#allocation7] sm:$0xff]
        %v1124 = vld [vmem:[#allocation7 + $0x8] sm:$0xff]
        %v1125 = vld [vmem:[#allocation7 + $0x10] sm:$0xff]
        %v1126 = vld [vmem:[#allocation7 + $0x18] sm:$0xff]
        %v1127 = vld [vmem:[#allocation7 + $0x20] sm:$0xff]
        %v1128 = vld [vmem:[#allocation7 + $0x28] sm:$0xff]
        %v1129 = vld [vmem:[#allocation7 + $0x30] sm:$0xff]
        %v1130 = vld [vmem:[#allocation7 + $0x38] sm:$0xff]
        %v1131 = vld [vmem:[#allocation7 + $0x40] sm:$0xff]
        %v1132 = vld [vmem:[#allocation7 + $0x48] sm:$0xff]
        %v1133 = vld [vmem:[#allocation7 + $0x50] sm:$0xff]
        %v1134 = vld [vmem:[#allocation7 + $0x58] sm:$0xff]
        %v1135 = vld [vmem:[#allocation7 + $0x60] sm:$0xff]
        %v1136 = vld [vmem:[#allocation7 + $0x68] sm:$0xff]
        %v1137 = vld [vmem:[#allocation7 + $0x70] sm:$0xff]
        %v1138 = vld [vmem:[#allocation7 + $0x78] sm:$0xff]
        %v1139 = vld [vmem:[#allocation7 + $0x80] sm:$0xff]
        %v1140 = vld [vmem:[#allocation7 + $0x88] sm:$0xff]
        %v1141 = vld [vmem:[#allocation7 + $0x90] sm:$0xff]
        %v1142 = vld [vmem:[#allocation7 + $0x98] sm:$0xff]
        %v1143 = vld [vmem:[#allocation7 + $0xa0] sm:$0xff]
        %v1144 = vld [vmem:[#allocation7 + $0xa8] sm:$0xff]
        %v1145 = vld [vmem:[#allocation7 + $0xb0] sm:$0xff]
        %v1146 = vld [vmem:[#allocation7 + $0xb8] sm:$0xff]
        %v1147 = vld [vmem:[#allocation7 + $0xc0] sm:$0xff]
        %v1148 = vld [vmem:[#allocation7 + $0xc8] sm:$0xff]
        %v1149 = vld [vmem:[#allocation7 + $0xd0] sm:$0xff]
        %v1150 = vld [vmem:[#allocation7 + $0xd8] sm:$0xff]
        %v1151 = vld [vmem:[#allocation7 + $0xe0] sm:$0xff]
        %v1152 = vld [vmem:[#allocation7 + $0xe8] sm:$0xff]
        %v1153 = vld [vmem:[#allocation7 + $0xf0] sm:$0xff]
        %v1154 = vld [vmem:[#allocation7 + $0xf8] sm:$0xff]
        %1155 = vmatprep.subr.mxu0 0.0
        %1156 = vmatpush1.msra.mxu0 %v1138
        %1157 = vmatprep.subr.mxu0 0.0
        %1158 = vmatpush1.msra.mxu0 %v1137
        %1159 = vmatprep.subr.mxu0 0.0
        %1160 = vmatpush1.msra.mxu0 %v1136
        %1161 = vmatprep.subr.mxu0 0.0
        %1162 = vmatpush1.msra.mxu0 %v1135
        %1163 = vmatprep.subr.mxu0 0.0
        %1164 = vmatpush1.msra.mxu0 %v1134
        %1165 = vmatprep.subr.mxu0 0.0
        %1166 = vmatpush1.msra.mxu0 %v1133
        %1167 = vmatprep.subr.mxu0 0.0
        %1168 = vmatpush1.msra.mxu0 %v1132
        %1169 = vmatprep.subr.mxu0 0.0
        %1170 = vmatpush1.msra.mxu0 %v1131
        %1171 = vmatprep.subr.mxu0 0.0
        %1172 = vmatpush1.msra.mxu0 %v1130
        %1173 = vmatprep.subr.mxu0 0.0
        %1174 = vmatpush1.msra.mxu0 %v1129
        %1175 = vmatprep.subr.mxu0 0.0
        %1176 = vmatpush1.msra.mxu0 %v1128
        %1177 = vmatprep.subr.mxu0 0.0
        %1178 = vmatpush1.msra.mxu0 %v1127
        %1179 = vmatprep.subr.mxu0 0.0
        %1180 = vmatpush1.msra.mxu0 %v1126
        %1181 = vmatprep.subr.mxu0 0.0
        %1182 = vmatpush1.msra.mxu0 %v1125
        %1183 = vmatprep.subr.mxu0 0.0
        %1184 = vmatpush1.msra.mxu0 %v1124
        %1185 = vmatprep.subr.mxu0 0.0
        %1186 = vmatpush1.msra.mxu0 %v1123
        %1187 = vmatprep.subr.mxu0 0.0
        %1188 = vmatpush2.msra.mxu0 %v1154
        %1189 = vmatprep.subr.mxu0 0.0
        %1190 = vmatpush2.msra.mxu0 %v1153
        %1191 = vmatprep.subr.mxu0 0.0
        %1192 = vmatpush2.msra.mxu0 %v1152
        %1193 = vmatprep.subr.mxu0 0.0
        %1194 = vmatpush2.msra.mxu0 %v1151
        %1195 = vmatprep.subr.mxu0 0.0
        %1196 = vmatpush2.msra.mxu0 %v1150
        %1197 = vmatprep.subr.mxu0 0.0
        %1198 = vmatpush2.msra.mxu0 %v1149
        %1199 = vmatprep.subr.mxu0 0.0
        %1200 = vmatpush2.msra.mxu0 %v1148
        %1201 = vmatprep.subr.mxu0 0.0
        %1202 = vmatpush2.msra.mxu0 %v1147
        %1203 = vmatprep.subr.mxu0 0.0
        %1204 = vmatpush2.msra.mxu0 %v1146
        %1205 = vmatprep.subr.mxu0 0.0
        %1206 = vmatpush2.msra.mxu0 %v1145
        %1207 = vmatprep.subr.mxu0 0.0
        %1208 = vmatpush2.msra.mxu0 %v1144
        %1209 = vmatprep.subr.mxu0 0.0
        %1210 = vmatpush2.msra.mxu0 %v1143
        %1211 = vmatprep.subr.mxu0 0.0
        %1212 = vmatpush2.msra.mxu0 %v1142
        %1213 = vmatprep.subr.mxu0 0.0
        %1214 = vmatpush2.msra.mxu0 %v1141
        %1215 = vmatprep.subr.mxu0 0.0
        %1216 = vmatpush2.msra.mxu0 %v1140
        %1217 = vmatprep.subr.mxu0 0.0
        %1218 = vmatpush2.msra.mxu0 %v1139
        %1219 = vmatprep.mubr.f32.mxu0 %v1120
        %1220 = vmatmul.mubr.f32.gmra.mxu0 %v933
        %v1221 = vpop.f32.mrf.mxu0
        %v1222 = vadd.f32 %v433, %v1221
        %v1223 = vpop.f32.mrf.mxu0
        %1224 = vdwg.mxu0
        %1225 = vadd.xlane.f32.xlu0 %v1222
        %v1226 = vpop.xlane.xlu0 %1225
        %v1227 = vmul.f32 %v1226, 0.03125
        %v1228 = vsub.f32 %v1222, %v1227
        %v1230 = vlaneseq
        %v1231 = vshrl.u32 %v1230, 7
        %v1232 = vsub.s32 0, %v1231
        %v1233 = vrot.slane %v436, %v1232
        %v1235 = vmul.f32 %v1228, %v1233
        %v1236 = vmul.f32 %v1235, %v1235
        %1237 = vadd.xlane.f32.xlu0 %v1236
        %v1238 = vpop.xlane.xlu0 %1237
        %v1239 = vmul.f32 %v1238, 0.03125
        %v1240 = vadd.f32 %v1239, 1e-05
        %v1241 = vrsqrt.pop %v1240
        %v1242 = vmul.f32 %v1228, %v1241
        %v1244 = vlaneseq
        %v1245 = vshrl.u32 %v1244, 7
        %v1246 = vsub.s32 0, %v1245
        %v1247 = vrot.slane %v434, %v1246
        %v1249 = vmul.f32 %v1242, %v1247
        %v1251 = vlaneseq
        %v1252 = vshrl.u32 %v1251, 7
        %v1253 = vsub.s32 0, %v1252
        %v1254 = vrot.slane %v435, %v1253
        %v1256 = vadd.f32 %v1249, %v1254
        %v1257 = vld [vmem:[#allocation8] sm:$0xff]
        %v1258 = vld [vmem:[#allocation8 + $0x8] sm:$0xff]
        %v1259 = vld [vmem:[#allocation8 + $0x10] sm:$0xff]
        %v1260 = vld [vmem:[#allocation8 + $0x18] sm:$0xff]
        %v1261 = vld [vmem:[#allocation8 + $0x20] sm:$0xff]
        %v1262 = vld [vmem:[#allocation8 + $0x28] sm:$0xff]
        %v1263 = vld [vmem:[#allocation8 + $0x30] sm:$0xff]
        %v1264 = vld [vmem:[#allocation8 + $0x38] sm:$0xff]
        %v1265 = vld [vmem:[#allocation8 + $0x40] sm:$0xff]
        %v1266 = vld [vmem:[#allocation8 + $0x48] sm:$0xff]
        %v1267 = vld [vmem:[#allocation8 + $0x50] sm:$0xff]
        %v1268 = vld [vmem:[#allocation8 + $0x58] sm:$0xff]
        %v1269 = vld [vmem:[#allocation8 + $0x60] sm:$0xff]
        %v1270 = vld [vmem:[#allocation8 + $0x68] sm:$0xff]
        %v1271 = vld [vmem:[#allocation8 + $0x70] sm:$0xff]
        %v1272 = vld [vmem:[#allocation8 + $0x78] sm:$0xff]
        %v1274 = vlaneseq
        %v1275 = vshrl.u32 %v1274, 7
        %v1276 = vsub.s32 0, %v1275
        %v1277 = vrot.slane %v437, %v1276
        %1279 = vmatprep.subr.mxu0 0.0
        %1280 = vmatpush1.msra.mxu0 %v1272
        %1281 = vmatprep.subr.mxu0 0.0
        %1282 = vmatpush1.msra.mxu0 %v1271
        %1283 = vmatprep.subr.mxu0 0.0
        %1284 = vmatpush1.msra.mxu0 %v1270
        %1285 = vmatprep.subr.mxu0 0.0
        %1286 = vmatpush1.msra.mxu0 %v1269
        %1287 = vmatprep.subr.mxu0 0.0
        %1288 = vmatpush1.msra.mxu0 %v1268
        %1289 = vmatprep.subr.mxu0 0.0
        %1290 = vmatpush1.msra.mxu0 %v1267
        %1291 = vmatprep.subr.mxu0 0.0
        %1292 = vmatpush1.msra.mxu0 %v1266
        %1293 = vmatprep.subr.mxu0 0.0
        %1294 = vmatpush1.msra.mxu0 %v1265
        %1295 = vmatprep.subr.mxu0 0.0
        %1296 = vmatpush1.msra.mxu0 %v1264
        %1297 = vmatprep.subr.mxu0 0.0
        %1298 = vmatpush1.msra.mxu0 %v1263
        %1299 = vmatprep.subr.mxu0 0.0
        %1300 = vmatpush1.msra.mxu0 %v1262
        %1301 = vmatprep.subr.mxu0 0.0
        %1302 = vmatpush1.msra.mxu0 %v1261
        %1303 = vmatprep.subr.mxu0 0.0
        %1304 = vmatpush1.msra.mxu0 %v1260
        %1305 = vmatprep.subr.mxu0 0.0
        %1306 = vmatpush1.msra.mxu0 %v1259
        %1307 = vmatprep.subr.mxu0 0.0
        %1308 = vmatpush1.msra.mxu0 %v1258
        %1309 = vmatprep.subr.mxu0 0.0
        %1310 = vmatpush1.msra.mxu0 %v1257
        %1311 = vmatprep.subr.mxu0 0.0
        %1312 = vmatpush2.msra.mxu0 0.0
        %1313 = vmatprep.subr.mxu0 0.0
        %1314 = vmatpush2.msra.mxu0 0.0
        %1315 = vmatprep.subr.mxu0 0.0
        %1316 = vmatpush2.msra.mxu0 0.0
        %1317 = vmatprep.subr.mxu0 0.0
        %1318 = vmatpush2.msra.mxu0 0.0
        %1319 = vmatprep.subr.mxu0 0.0
        %1320 = vmatpush2.msra.mxu0 0.0
        %1321 = vmatprep.subr.mxu0 0.0
        %1322 = vmatpush2.msra.mxu0 0.0
        %1323 = vmatprep.subr.mxu0 0.0
        %1324 = vmatpush2.msra.mxu0 0.0
        %1325 = vmatprep.subr.mxu0 0.0
        %1326 = vmatpush2.msra.mxu0 0.0
        %1327 = vmatprep.subr.mxu0 0.0
        %1328 = vmatpush2.msra.mxu0 0.0
        %1329 = vmatprep.subr.mxu0 0.0
        %1330 = vmatpush2.msra.mxu0 0.0
        %1331 = vmatprep.subr.mxu0 0.0
        %1332 = vmatpush2.msra.mxu0 0.0
        %1333 = vmatprep.subr.mxu0 0.0
        %1334 = vmatpush2.msra.mxu0 0.0
        %1335 = vmatprep.subr.mxu0 0.0
        %1336 = vmatpush2.msra.mxu0 0.0
        %1337 = vmatprep.subr.mxu0 0.0
        %1338 = vmatpush2.msra.mxu0 0.0
        %1339 = vmatprep.subr.mxu0 0.0
        %1340 = vmatpush2.msra.mxu0 0.0
        %1341 = vmatprep.subr.mxu0 0.0
        %1342 = vmatpush2.msra.mxu0 0.0
        %1343 = vmatprep.mubr.f32.mxu0 0.0
        %1344 = vmatmul.mubr.f32.gmra.mxu0 %v1256
        %v1345 = vpop.f32.mrf.mxu0
        %v1346 = vadd.f32 %v1277, %v1345
        %v1347 = vpop.f32.mrf.mxu0
        %1348 = vdwg.mxu0
        %v1349 = vmax.f32 %v1346, 0.0
        %v1350 = vld [vmem:[#allocation10] sm:$0xff]
        %v1351 = vld [vmem:[#allocation10 + $0x8] sm:$0xff]
        %v1352 = vld [vmem:[#allocation10 + $0x10] sm:$0xff]
        %v1353 = vld [vmem:[#allocation10 + $0x18] sm:$0xff]
        %v1354 = vld [vmem:[#allocation10 + $0x20] sm:$0xff]
        %v1355 = vld [vmem:[#allocation10 + $0x28] sm:$0xff]
        %v1356 = vld [vmem:[#allocation10 + $0x30] sm:$0xff]
        %v1357 = vld [vmem:[#allocation10 + $0x38] sm:$0xff]
        %v1358 = vld [vmem:[#allocation10 + $0x40] sm:$0xff]
        %v1359 = vld [vmem:[#allocation10 + $0x48] sm:$0xff]
        %v1360 = vld [vmem:[#allocation10 + $0x50] sm:$0xff]
        %v1361 = vld [vmem:[#allocation10 + $0x58] sm:$0xff]
        %v1362 = vld [vmem:[#allocation10 + $0x60] sm:$0xff]
        %v1363 = vld [vmem:[#allocation10 + $0x68] sm:$0xff]
        %v1364 = vld [vmem:[#allocation10 + $0x70] sm:$0xff]
        %v1365 = vld [vmem:[#allocation10 + $0x78] sm:$0xff]
        %v1367 = vlaneseq
        %v1368 = vshrl.u32 %v1367, 7
        %v1369 = vsub.s32 0, %v1368
        %v1370 = vrot.slane %v438, %v1369
        %1372 = vmatprep.subr.mxu0 0.0
        %1373 = vmatpush1.msra.mxu0 %v1365
        %1374 = vmatprep.subr.mxu0 0.0
        %1375 = vmatpush1.msra.mxu0 %v1364
        %1376 = vmatprep.subr.mxu0 0.0
        %1377 = vmatpush1.msra.mxu0 %v1363
        %1378 = vmatprep.subr.mxu0 0.0
        %1379 = vmatpush1.msra.mxu0 %v1362
        %1380 = vmatprep.subr.mxu0 0.0
        %1381 = vmatpush1.msra.mxu0 %v1361
        %1382 = vmatprep.subr.mxu0 0.0
        %1383 = vmatpush1.msra.mxu0 %v1360
        %1384 = vmatprep.subr.mxu0 0.0
        %1385 = vmatpush1.msra.mxu0 %v1359
        %1386 = vmatprep.subr.mxu0 0.0
        %1387 = vmatpush1.msra.mxu0 %v1358
        %1388 = vmatprep.subr.mxu0 0.0
        %1389 = vmatpush1.msra.mxu0 %v1357
        %1390 = vmatprep.subr.mxu0 0.0
        %1391 = vmatpush1.msra.mxu0 %v1356
        %1392 = vmatprep.subr.mxu0 0.0
        %1393 = vmatpush1.msra.mxu0 %v1355
        %1394 = vmatprep.subr.mxu0 0.0
        %1395 = vmatpush1.msra.mxu0 %v1354
        %1396 = vmatprep.subr.mxu0 0.0
        %1397 = vmatpush1.msra.mxu0 %v1353
        %1398 = vmatprep.subr.mxu0 0.0
        %1399 = vmatpush1.msra.mxu0 %v1352
        %1400 = vmatprep.subr.mxu0 0.0
        %1401 = vmatpush1.msra.mxu0 %v1351
        %1402 = vmatprep.subr.mxu0 0.0
        %1403 = vmatpush1.msra.mxu0 %v1350
        %1404 = vmatprep.subr.mxu0 0.0
        %1405 = vmatpush2.msra.mxu0 0.0
        %1406 = vmatprep.subr.mxu0 0.0
        %1407 = vmatpush2.msra.mxu0 0.0
        %1408 = vmatprep.subr.mxu0 0.0
        %1409 = vmatpush2.msra.mxu0 0.0
        %1410 = vmatprep.subr.mxu0 0.0
        %1411 = vmatpush2.msra.mxu0 0.0
        %1412 = vmatprep.subr.mxu0 0.0
        %1413 = vmatpush2.msra.mxu0 0.0
        %1414 = vmatprep.subr.mxu0 0.0
        %1415 = vmatpush2.msra.mxu0 0.0
        %1416 = vmatprep.subr.mxu0 0.0
        %1417 = vmatpush2.msra.mxu0 0.0
        %1418 = vmatprep.subr.mxu0 0.0
        %1419 = vmatpush2.msra.mxu0 0.0
        %1420 = vmatprep.subr.mxu0 0.0
        %1421 = vmatpush2.msra.mxu0 0.0
        %1422 = vmatprep.subr.mxu0 0.0
        %1423 = vmatpush2.msra.mxu0 0.0
        %1424 = vmatprep.subr.mxu0 0.0
        %1425 = vmatpush2.msra.mxu0 0.0
        %1426 = vmatprep.subr.mxu0 0.0
        %1427 = vmatpush2.msra.mxu0 0.0
        %1428 = vmatprep.subr.mxu0 0.0
        %1429 = vmatpush2.msra.mxu0 0.0
        %1430 = vmatprep.subr.mxu0 0.0
        %1431 = vmatpush2.msra.mxu0 0.0
        %1432 = vmatprep.subr.mxu0 0.0
        %1433 = vmatpush2.msra.mxu0 0.0
        %1434 = vmatprep.subr.mxu0 0.0
        %1435 = vmatpush2.msra.mxu0 0.0
        %1436 = vmatprep.mubr.f32.mxu0 0.0
        %1437 = vmatmul.mubr.f32.gmra.mxu0 %v1349
        %v1438 = vpop.f32.mrf.mxu0
        %v1439 = vadd.f32 %v1370, %v1438
        %v1440 = vpop.f32.mrf.mxu0
        %1441 = vdwg.mxu0
        %v1442 = vadd.f32 %v1439, %v1256
        %1443 = vadd.xlane.f32.xlu0 %v1442
        %v1444 = vpop.xlane.xlu0 %1443
        %v1445 = vmul.f32 %v1444, 0.03125
        %v1446 = vsub.f32 %v1442, %v1445
        %v1447 = vmul.f32 %v1446, %v1233
        %v1448 = vmul.f32 %v1447, %v1447
        %1449 = vadd.xlane.f32.xlu0 %v1448
        %v1450 = vpop.xlane.xlu0 %1449
        %v1451 = vmul.f32 %v1450, 0.03125
        %v1452 = vadd.f32 %v1451, 1e-05
        %v1453 = vrsqrt.pop %v1452
        %v1454 = vmul.f32 %v1446, %v1453
        %v1455 = vmul.f32 %v1454, %v1247
        %v1456 = vadd.f32 %v1455, %v1254
        %1457 = vst [vmem:[%s432] sm:$0xff] %v1456
        %s1458 = sand.u32 %s252, 1
        %s1459 = scalar_lea.sflag [#allocation4], %s1458
        %s1460 = sand.u32 %s252, 1
        %s1461 = smul.addr %s1460, 8
        %s1462 = scalar_lea.vmem [#allocation11], %s1461
        // Predicated region
        $region81: #{tpu_custom_call.1} parent=59 // pred_check
          %p1463 = pneg %p262
        $region82: #{tpu_custom_call.1} parent=59 // pred_check_branch
          %1465 = sbr.rel (%p1463) target = $region84
        $region83: #{tpu_custom_call.1} parent=59 // pred_region
          %s1467 = ssub.s32 128, 128
          %1468 = vsyncadd %s1459, %s1467
          %s1469 = smul.addr %s29, 128
          %s1470 = scalar_lea.hbm %s10, %s1469
          %s1472 = sshll.u32 %s1462, 4
          %s1473 = int_to_ptr.vmem [resolvable:$true] %s1472
          %1475 = dma.vmem_to_hbm [thread:$0]  %s1473, 128, %s1470, %s1459
        $region84: #{tpu_custom_call.1} parent=59 // pred_fallthru
          _
      $region60: #{tpu_custom_call.1} parent=5 // pred_fallthru
        _
      %p1476 = scmp.le.s32.totalorder 2, %s24
      // Predicated region
      $region85: #{tpu_custom_call.1} parent=5 // pred_check
        %p1477 = pneg %p1476
      $region86: #{tpu_custom_call.1} parent=5 // pred_check_branch
        %1479 = sbr.rel (%p1477) target = $region88
      $region87: #{tpu_custom_call.1} parent=5 // pred_region
        %s1480 = ssub.s32 %s24, 2
        // Predicated region
        $region89: #{tpu_custom_call.1} parent=87 // pred_check
          %p1481 = pneg %p268
        $region90: #{tpu_custom_call.1} parent=87 // pred_check_branch
          %1483 = sbr.rel (%p1481) target = $region92
        $region91: #{tpu_custom_call.1} parent=87 // pred_region
          %s1484 = sand.u32 %s253, 1
          %s1485 = scalar_lea.sflag [#allocation4], %s1484
          %s1486 = sand.u32 %s253, 1
          %s1487 = smul.addr %s1486, 8
          %s1488 = scalar_lea.vmem [#allocation11], %s1487
          %1489 = dma.done %s1485, 128
        $region92: #{tpu_custom_call.1} parent=87 // pred_fallthru
          _
      $region88: #{tpu_custom_call.1} parent=5 // pred_fallthru
        _
    $region6: #{tpu_custom_call.1} parent=1 // loop_footer
      %s28 = sadd.s32 1, %s24
    $region7: #{tpu_custom_call.1} parent=1 // loop_footer_branch
      %23 = sbr.rel target = $region3
    $region8: #{tpu_custom_call.1} parent=1 // loop_exit
      _
    %1490 = vsyncpa [#allocation3], 1
    %s1491 = scalar_lea.sflag [#allocation3], 1
    %1492 = vsyncpa %s1491, 1
    %1493 = vsyncpa [#allocation6], 1
    %1494 = vsyncpa [#allocation9], 1
    %1495 = vsyncpa [#allocation4], 1
    %s1496 = scalar_lea.sflag [#allocation4], 1
    %1497 = vsyncpa %s1496, 1

</llo_original>
